<compile_context>
chip_gen: v5e
topology: v5e:2x2
jax: 0.10.0
libtpu: 0.0.40
codegen_flags: <defaults>
</compile_context>

<pallas_src>
import math
import functools

import jax
import jax.numpy as jnp
from jax.experimental import pallas as pl
from jax.experimental.pallas import tpu as pltpu


def _attention_kernel(num_heads, head_dim, write_probs, probs_dtype,
                      x_ref, mask_ref,
                      wqkv_ref, bqkv_ref, wo_ref, bo_ref,
                      gamma_ref, beta_ref,
                      out_ref, *maybe_probs_ref):
    H, D = num_heads, head_dim
    x = x_ref[...]                        # (Bt, S, E) f32
    Bt, S, E = x.shape
    xm = x.reshape(Bt * S, E)             # lane-dense M dimension for the matmuls

    # ---- fused QKV projection (1/sqrt(D) pre-folded into the Q columns)
    qkv = jnp.dot(xm.astype(jnp.bfloat16), wqkv_ref[...],
                  preferred_element_type=jnp.float32) + bqkv_ref[...]   # (Bt*S, 3E)

    # head-major (Bt*H, S, D) views: single leading batch dim keeps the einsums
    # in the documented Mosaic-safe 'bqd,bkd->bqk' form.
    def head_major(col):
        t = qkv[:, col * E:(col + 1) * E].reshape(Bt, S, H, D)
        return t.transpose(0, 2, 1, 3).reshape(Bt * H, S, D)

    q, k, v = head_major(0), head_major(1), head_major(2)

    s = jnp.einsum("bqd,bkd->bqk",
                   q.astype(jnp.bfloat16), k.astype(jnp.bfloat16),
                   preferred_element_type=jnp.float32)                  # (Bt*H, S, S)
    s = s.reshape(Bt, H, S, S) + mask_ref[...][:, None, :, :].astype(jnp.float32)
    s = s - jnp.max(s, axis=-1, keepdims=True)
    e = jnp.exp(s)
    denom = jnp.sum(e, axis=-1, keepdims=True)
    if write_probs:
        # exact reciprocal: stored probability rows must sum to 1 downstream
        p = e / denom
        maybe_probs_ref[0][...] = p.astype(probs_dtype)
    else:
        # approx reciprocal rides the EUP slot, keeps the VALU free
        p = e * pl.reciprocal(denom, approx=True)

    ctx = jnp.einsum("bqk,bkd->bqd",
                     p.reshape(Bt * H, S, S).astype(jnp.bfloat16),
                     v.astype(jnp.bfloat16),
                     preferred_element_type=jnp.float32)                # (Bt*H, S, D)
    ctx = ctx.reshape(Bt, H, S, D).transpose(0, 2, 1, 3).reshape(Bt * S, E)

    # ---- SelfOutput: ReLU(dense(ctx)) (+ dropout == identity) + residual, LayerNorm
    h1 = jnp.dot(ctx.astype(jnp.bfloat16), wo_ref[...],
                 preferred_element_type=jnp.float32) + bo_ref[...]
    h1 = jnp.maximum(h1, 0.0)
    y = h1 + xm
    # two-pass variance: avoids E[y^2]-E[y]^2 cancellation when |mean| >> std
    mean = jnp.mean(y, axis=-1, keepdims=True)
    cent = y - mean
    var = jnp.mean(cent * cent, axis=-1, keepdims=True)
    yn = cent * jax.lax.rsqrt(var + 1e-5)
    out_ref[...] = (yn * gamma_ref[...] + beta_ref[...]).reshape(Bt, S, E)


def prepare_attention_params(params, num_heads):
    """Fuse / pre-scale / cast the weights ONCE (hoisted out of the hot path)."""
    E = params["wq"].shape[0]
    D = E // num_heads
    scale = 1.0 / math.sqrt(D)
    wqkv = jnp.concatenate([params["wq"] * scale, params["wk"], params["wv"]],
                           axis=1).astype(jnp.bfloat16)          # (E, 3E)
    bqkv = jnp.concatenate([params["bq"] * scale, params["bk"], params["bv"]],
                           axis=1).astype(jnp.float32)           # (1, 3E)
    return {
        "wqkv": wqkv, "bqkv": bqkv,
        "wo": params["wo"].astype(jnp.bfloat16),
        "bo": params["bo"].astype(jnp.float32),
        "gamma": params["gamma"].astype(jnp.float32),
        "beta": params["beta"].astype(jnp.float32),
    }


def _pick_batch_block(B, S, target_rows=256):
    """Largest divisor of B with Bt*S <= target_rows, keeping >= 2 grid steps."""
    best = 1
    for bt in range(1, B + 1):
        if B % bt == 0 and bt * S <= max(target_rows, S):
            best = bt
    if B >= 2 and B // best < 2:        # feed both v7x TensorCores
        for bt in range(best - 1, 0, -1):
            if B % bt == 0 and B // bt >= 2:
                return bt
    return best


def attention_pallas(x, mask, fused_params, num_heads, *,
                     return_probs=True, probs_dtype=jnp.bfloat16,
                     batch_block=None):
    B, S, E = x.shape
    H = num_heads
    D = E // H

    Bt = batch_block if batch_block is not None else _pick_batch_block(B, S)
    assert B % Bt == 0
    grid = (B // Bt,)

    # additive mask values fit comfortably in bf16; halves the O(B*S^2) mask stream.
    # TODO(synk): for masks derivable from lengths, scalar-prefetch a (B,) length
    #             vector and build the mask in-kernel with broadcasted_iota.
    mask = mask.astype(jnp.bfloat16)

    kernel = functools.partial(_attention_kernel, H, D, return_probs, probs_dtype)

    def const_spec(shape):
        nd = len(shape)
        return pl.BlockSpec(shape, lambda b, _nd=nd: (0,) * _nd)

    in_specs = [
        pl.BlockSpec((Bt, S, E), lambda b: (b, 0, 0)),       # hidden_states block
        pl.BlockSpec((Bt, S, S), lambda b: (b, 0, 0)),       # additive mask block
        const_spec((E, 3 * E)), const_spec((1, 3 * E)),      # fused Wqkv, bqkv
        const_spec((E, E)), const_spec((1, E)),              # Wo, bo
        const_spec((1, E)), const_spec((1, E)),              # LayerNorm gamma, beta
    ]
    out_specs = [pl.BlockSpec((Bt, S, E), lambda b: (b, 0, 0))]
    out_shape = [jax.ShapeDtypeStruct((B, S, E), jnp.float32)]
    if return_probs:
        out_specs.append(pl.BlockSpec((Bt, H, S, S), lambda b: (b, 0, 0, 0)))
        out_shape.append(jax.ShapeDtypeStruct((B, H, S, S), probs_dtype))

    # advisory cost estimate for the XLA scheduler
    flops = (2 * B * S * E * 3 * E            # QKV projection
             + 4 * B * H * S * S * D          # scores + context
             + 2 * B * S * E * E)             # output dense
    transcendentals = B * H * S * S + B * S
    bytes_accessed = (4 * 2 * B * S * E               # x in, out
                      + 2 * B * S * S                 # bf16 mask
                      + 2 * (E * 3 * E + E * E)       # bf16 weights
                      + 4 * (3 * E + 4 * E))          # biases + LN params
    if return_probs:
        bytes_accessed += jnp.dtype(probs_dtype).itemsize * B * H * S * S

    # explicit VMEM budget (double-buffered I/O blocks + weights + f32 intermediates),
    # clamped so it stays sane on v7x's 64 MiB VMEM.
    per_step = (2 * 4 * Bt * S * E                 # x block x2 buffers
                + 2 * 2 * Bt * S * S               # mask block
                + 2 * 4 * Bt * S * E               # out block
                + 2 * (E * 3 * E + E * E)          # bf16 weights
                + 4 * (Bt * S * 3 * E + 2 * Bt * H * S * S + 2 * Bt * S * E))
    if return_probs:
        per_step += 2 * jnp.dtype(probs_dtype).itemsize * Bt * H * S * S
    vmem_limit = int(min(100 * 2**20, max(32 * 2**20, 2 * per_step)))

    res = pl.pallas_call(
        kernel,
        grid=grid,
        in_specs=in_specs,
        out_specs=tuple(out_specs),
        out_shape=tuple(out_shape),
        compiler_params=pltpu.CompilerParams(
            dimension_semantics=("parallel",),
            vmem_limit_bytes=vmem_limit),
        cost_estimate=pl.CostEstimate(flops=int(flops),
                                      transcendentals=int(transcendentals),
                                      bytes_accessed=int(bytes_accessed)),
    )(x, mask, fused_params["wqkv"], fused_params["bqkv"],
      fused_params["wo"], fused_params["bo"],
      fused_params["gamma"], fused_params["beta"])

    if return_probs:
        out, probs = res
        return out, probs
    (out,) = res
    return out, None


def attention_ref(x, mask, params, num_heads):
    """Pure-JAX f32 reference matching the PyTorch forward (eval mode)."""
    B, S, E = x.shape
    D = E // num_heads
    q = x @ params["wq"] + params["bq"][0]
    k = x @ params["wk"] + params["bk"][0]
    v = x @ params["wv"] + params["bv"][0]

    def split(t):
        return t.reshape(B, S, num_heads, D).transpose(0, 2, 1, 3)

    qh, kh, vh = split(q), split(k), split(v)
    s = jnp.einsum("bhsd,bhtd->bhst", qh, kh) / math.sqrt(D) + mask[:, None]
    p = jax.nn.softmax(s, axis=-1)
    ctx = jnp.einsum("bhst,bhtd->bhsd", p, vh).transpose(0, 2, 1, 3).reshape(B, S, E)
    h1 = jnp.maximum(ctx @ params["wo"] + params["bo"][0], 0.0)
    y = h1 + x
    mean = y.mean(-1, keepdims=True)
    var = ((y - mean) ** 2).mean(-1, keepdims=True)
    yn = (y - mean) / jnp.sqrt(var + 1e-5)
    return yn * params["gamma"][0] + params["beta"][0], p


if __name__ == "__main__":
    B, S, E, H = 2, 8, 32, 4   # batch, seq, embedding_dim, num_heads (head_dim = 8)

    key = jax.random.PRNGKey(0)
    keys = jax.random.split(key, 12)
    scale = 1.0 / math.sqrt(E)
    params = {
        "wq": jax.random.normal(keys[0], (E, E), jnp.float32) * scale,
        "bq": jax.random.normal(keys[1], (1, E), jnp.float32) * 0.02,
        "wk": jax.random.normal(keys[2], (E, E), jnp.float32) * scale,
        "bk": jax.random.normal(keys[3], (1, E), jnp.float32) * 0.02,
        "wv": jax.random.normal(keys[4], (E, E), jnp.float32) * scale,
        "bv": jax.random.normal(keys[5], (1, E), jnp.float32) * 0.02,
        "wo": jax.random.normal(keys[6], (E, E), jnp.float32) * scale,
        "bo": jax.random.normal(keys[7], (1, E), jnp.float32) * 0.02,
        "gamma": jnp.ones((1, E), jnp.float32),
        "beta": jnp.zeros((1, E), jnp.float32),
    }

    x = jax.random.normal(keys[8], (B, S, E), jnp.float32)
    mask = jax.random.normal(keys[9], (B, S, S), jnp.float32) * 0.1  # additive mask

    fused = prepare_attention_params(params, H)   # one-time weight prep (off hot path)

    # full path: output + attention_probs (bf16)
    out, probs = attention_pallas(x, mask, fused, H, return_probs=True)
    out = jax.block_until_ready(out)
    probs = jax.block_until_ready(probs)

    # lean path: no probs writeback (exercises the approx-reciprocal branch)
    out_lean, _ = attention_pallas(x, mask, fused, H, return_probs=False)
    out_lean = jax.block_until_ready(out_lean)

    out_ref, probs_ref = attention_ref(x, mask, params, H)
    assert out.shape == (B, S, E) and probs.shape == (B, H, S, S)
    # tolerances relaxed vs f32 reference: matmul operands run in bf16 on the MXU,
    # probs are stored in bf16
    assert jnp.allclose(out, out_ref, atol=5e-2, rtol=5e-2)
    assert jnp.allclose(out_lean, out_ref, atol=5e-2, rtol=5e-2)
    assert jnp.allclose(probs.astype(jnp.float32), probs_ref, atol=2e-2, rtol=2e-2)

    print("KERNEL_OK")
</pallas_src>

<mosaic_0001>
module attributes {stable_mosaic.version = 11 : i64} {
  func.func @_attention_kernel(%arg0: i32, %arg1: memref<1x8x32xf32, #tpu.memory_space<vmem>>, %arg2: memref<1x8x8xbf16, #tpu.memory_space<vmem>>, %arg3: memref<32x96xbf16, #tpu.memory_space<vmem>>, %arg4: memref<1x96xf32, #tpu.memory_space<vmem>>, %arg5: memref<32x32xbf16, #tpu.memory_space<vmem>>, %arg6: memref<1x32xf32, #tpu.memory_space<vmem>>, %arg7: memref<1x32xf32, #tpu.memory_space<vmem>>, %arg8: memref<1x32xf32, #tpu.memory_space<vmem>>, %arg9: memref<1x8x32xf32, #tpu.memory_space<vmem>>, %arg10: memref<1x4x8x8xbf16, #tpu.memory_space<vmem>>) attributes {dimension_semantics = [#tpu.dimension_semantics<parallel>], iteration_bounds = array<i64: 2>, scalar_prefetch = 0 : i64, scratch_operands = 0 : i64, tpu.core_type = #tpu.core_type<tc>, window_params = [{transform_indices = @transform_0, window_bounds = array<i64: 1, 8, 32>}, {transform_indices = @transform_1, window_bounds = array<i64: 1, 8, 8>}, {pipeline_mode = #tpu.pipeline_mode<synchronous>, transform_indices = @transform_2, window_bounds = array<i64: 32, 96>}, {pipeline_mode = #tpu.pipeline_mode<synchronous>, transform_indices = @transform_3, window_bounds = array<i64: 1, 96>}, {pipeline_mode = #tpu.pipeline_mode<synchronous>, transform_indices = @transform_4, window_bounds = array<i64: 32, 32>}, {pipeline_mode = #tpu.pipeline_mode<synchronous>, transform_indices = @transform_5, window_bounds = array<i64: 1, 32>}, {pipeline_mode = #tpu.pipeline_mode<synchronous>, transform_indices = @transform_6, window_bounds = array<i64: 1, 32>}, {pipeline_mode = #tpu.pipeline_mode<synchronous>, transform_indices = @transform_7, window_bounds = array<i64: 1, 32>}, {transform_indices = @transform_8, window_bounds = array<i64: 1, 8, 32>}, {transform_indices = @transform_9, window_bounds = array<i64: 1, 4, 8, 8>}]} {
    %c0 = arith.constant 0 : index
    %c0_0 = arith.constant 0 : index
    %c0_1 = arith.constant 0 : index
    %0 = vector.load %arg1[%c0, %c0_0, %c0_1] : memref<1x8x32xf32, #tpu.memory_space<vmem>>, vector<1x8x32xf32>
    %1 = vector.shape_cast %0 : vector<1x8x32xf32> to vector<8x32xf32>
    %2 = arith.truncf %1 : vector<8x32xf32> to vector<8x32xbf16>
    %c0_2 = arith.constant 0 : index
    %c0_3 = arith.constant 0 : index
    %3 = vector.load %arg3[%c0_2, %c0_3] : memref<32x96xbf16, #tpu.memory_space<vmem>>, vector<32x96xbf16>
    %cst = arith.constant dense<0.000000e+00> : vector<8x96xf32>
    %4 = tpu.matmul %2, %3, %cst {dimension_numbers = #tpu.dot_dimension_numbers<[1], [0], [0], [1], [0, 0, 1, 1], [], []>} : vector<8x32xbf16>, vector<32x96xbf16>, vector<8x96xf32> -> vector<8x96xf32>
    %c0_4 = arith.constant 0 : index
    %c0_5 = arith.constant 0 : index
    %5 = vector.load %arg4[%c0_4, %c0_5] : memref<1x96xf32, #tpu.memory_space<vmem>>, vector<1x96xf32>
    %6 = vector.broadcast %5 : vector<1x96xf32> to vector<8x96xf32>
    %7 = arith.addf %4, %6 : vector<8x96xf32>
    %8 = vector.extract_strided_slice %7 {offsets = [0, 0], sizes = [8, 32], strides = [1, 1]} : vector<8x96xf32> to vector<8x32xf32>
    %9 = vector.shape_cast %8 : vector<8x32xf32> to vector<1x8x4x8xf32>
    %10 = tpu.transpose %9, [0, 2, 1, 3] : vector<1x8x4x8xf32> -> vector<1x4x8x8xf32>
    %11 = vector.shape_cast %10 : vector<1x4x8x8xf32> to vector<4x8x8xf32>
    %12 = vector.extract_strided_slice %7 {offsets = [0, 32], sizes = [8, 32], strides = [1, 1]} : vector<8x96xf32> to vector<8x32xf32>
    %13 = vector.shape_cast %12 : vector<8x32xf32> to vector<1x8x4x8xf32>
    %14 = tpu.transpose %13, [0, 2, 1, 3] : vector<1x8x4x8xf32> -> vector<1x4x8x8xf32>
    %15 = vector.shape_cast %14 : vector<1x4x8x8xf32> to vector<4x8x8xf32>
    %16 = vector.extract_strided_slice %7 {offsets = [0, 64], sizes = [8, 32], strides = [1, 1]} : vector<8x96xf32> to vector<8x32xf32>
    %17 = vector.shape_cast %16 : vector<8x32xf32> to vector<1x8x4x8xf32>
    %18 = tpu.transpose %17, [0, 2, 1, 3] : vector<1x8x4x8xf32> -> vector<1x4x8x8xf32>
    %19 = vector.shape_cast %18 : vector<1x4x8x8xf32> to vector<4x8x8xf32>
    %20 = arith.truncf %11 : vector<4x8x8xf32> to vector<4x8x8xbf16>
    %21 = arith.truncf %15 : vector<4x8x8xf32> to vector<4x8x8xbf16>
    "tpu.trace_start"() <{level = 10 : i32, message = "bqd,bkd->bqk"}> : () -> ()
    %cst_6 = arith.constant dense<0.000000e+00> : vector<4x8x8xf32>
    %22 = tpu.matmul %20, %21, %cst_6 {dimension_numbers = #tpu.dot_dimension_numbers<[2], [2], [1], [1], [0, 0, 0, 1, 1, 1], [0], [0]>} : vector<4x8x8xbf16>, vector<4x8x8xbf16>, vector<4x8x8xf32> -> vector<4x8x8xf32>
    "tpu.trace_stop"() : () -> ()
    %23 = vector.shape_cast %22 : vector<4x8x8xf32> to vector<1x4x8x8xf32>
    %c0_7 = arith.constant 0 : index
    %c0_8 = arith.constant 0 : index
    %c0_9 = arith.constant 0 : index
    %24 = vector.load %arg2[%c0_7, %c0_8, %c0_9] : memref<1x8x8xbf16, #tpu.memory_space<vmem>>, vector<1x8x8xbf16>
    %25 = vector.shape_cast %24 : vector<1x8x8xbf16> to vector<1x1x8x8xbf16>
    %26 = arith.extf %25 : vector<1x1x8x8xbf16> to vector<1x1x8x8xf32>
    %27 = vector.broadcast %26 : vector<1x1x8x8xf32> to vector<1x4x8x8xf32>
    %28 = arith.addf %23, %27 : vector<1x4x8x8xf32>
    %cst_10 = arith.constant dense<0xFF800000> : vector<1x4x8xf32>
    %29 = vector.multi_reduction <maximumf>, %28, %cst_10 [3] : vector<1x4x8x8xf32> to vector<1x4x8xf32>
    %30 = vector.shape_cast %29 : vector<1x4x8xf32> to vector<1x4x8x1xf32>
    %31 = vector.broadcast %30 : vector<1x4x8x1xf32> to vector<1x4x8x8xf32>
    %32 = arith.subf %28, %31 : vector<1x4x8x8xf32>
    %33 = math.exp %32 : vector<1x4x8x8xf32>
    %cst_11 = arith.constant dense<0.000000e+00> : vector<1x4x8xf32>
    %34 = vector.multi_reduction <add>, %33, %cst_11 [3] : vector<1x4x8x8xf32> to vector<1x4x8xf32>
    %35 = vector.shape_cast %34 : vector<1x4x8xf32> to vector<1x4x8x1xf32>
    %36 = vector.broadcast %35 : vector<1x4x8x1xf32> to vector<1x4x8x8xf32>
    %37 = arith.divf %33, %36 : vector<1x4x8x8xf32>
    %38 = arith.truncf %37 : vector<1x4x8x8xf32> to vector<1x4x8x8xbf16>
    %c0_12 = arith.constant 0 : index
    %c0_13 = arith.constant 0 : index
    %c0_14 = arith.constant 0 : index
    %c0_15 = arith.constant 0 : index
    %39 = vector.load %arg10[%c0_12, %c0_13, %c0_14, %c0_15] : memref<1x4x8x8xbf16, #tpu.memory_space<vmem>>, vector<1x4x8x8xbf16>
    tpu.vector_store %arg10[%c0_12, %c0_13, %c0_14, %c0_15], %38 {strides = array<i32>} : memref<1x4x8x8xbf16, #tpu.memory_space<vmem>>, vector<1x4x8x8xbf16>,
    %40 = vector.shape_cast %37 : vector<1x4x8x8xf32> to vector<4x8x8xf32>
    %41 = arith.truncf %40 : vector<4x8x8xf32> to vector<4x8x8xbf16>
    %42 = arith.truncf %19 : vector<4x8x8xf32> to vector<4x8x8xbf16>
    "tpu.trace_start"() <{level = 10 : i32, message = "bqk,bkd->bqd"}> : () -> ()
    %cst_16 = arith.constant dense<0.000000e+00> : vector<4x8x8xf32>
    %43 = tpu.matmul %41, %42, %cst_16 {dimension_numbers = #tpu.dot_dimension_numbers<[2], [1], [1], [2], [0, 0, 0, 1, 1, 2], [0], [0]>} : vector<4x8x8xbf16>, vector<4x8x8xbf16>, vector<4x8x8xf32> -> vector<4x8x8xf32>
    "tpu.trace_stop"() : () -> ()
    %44 = vector.shape_cast %43 : vector<4x8x8xf32> to vector<1x4x8x8xf32>
    %45 = tpu.transpose %44, [0, 2, 1, 3] : vector<1x4x8x8xf32> -> vector<1x8x4x8xf32>
    %46 = vector.shape_cast %45 : vector<1x8x4x8xf32> to vector<8x32xf32>
    %47 = arith.truncf %46 : vector<8x32xf32> to vector<8x32xbf16>
    %c0_17 = arith.constant 0 : index
    %c0_18 = arith.constant 0 : index
    %48 = vector.load %arg5[%c0_17, %c0_18] : memref<32x32xbf16, #tpu.memory_space<vmem>>, vector<32x32xbf16>
    %cst_19 = arith.constant dense<0.000000e+00> : vector<8x32xf32>
    %49 = tpu.matmul %47, %48, %cst_19 {dimension_numbers = #tpu.dot_dimension_numbers<[1], [0], [0], [1], [0, 0, 1, 1], [], []>} : vector<8x32xbf16>, vector<32x32xbf16>, vector<8x32xf32> -> vector<8x32xf32>
    %c0_20 = arith.constant 0 : index
    %c0_21 = arith.constant 0 : index
    %50 = vector.load %arg6[%c0_20, %c0_21] : memref<1x32xf32, #tpu.memory_space<vmem>>, vector<1x32xf32>
    %51 = vector.broadcast %50 : vector<1x32xf32> to vector<8x32xf32>
    %52 = arith.addf %49, %51 : vector<8x32xf32>
    %cst_22 = arith.constant 0.000000e+00 : f32
    %53 = vector.broadcast %cst_22 : f32 to vector<8x32xf32>
    %54 = arith.maximumf %52, %53 : vector<8x32xf32>
    %55 = arith.addf %54, %1 : vector<8x32xf32>
    %cst_23 = arith.constant dense<0.000000e+00> : vector<8xf32>
    %56 = vector.multi_reduction <add>, %55, %cst_23 [1] : vector<8x32xf32> to vector<8xf32>
    %57 = vector.shape_cast %56 : vector<8xf32> to vector<8x1xf32>
    %cst_24 = arith.constant 3.200000e+01 : f32
    %58 = vector.broadcast %cst_24 : f32 to vector<8x1xf32>
    %59 = arith.divf %57, %58 : vector<8x1xf32>
    %60 = vector.broadcast %59 : vector<8x1xf32> to vector<8x32xf32>
    %61 = arith.subf %55, %60 : vector<8x32xf32>
    %62 = arith.mulf %61, %61 : vector<8x32xf32>
    %cst_25 = arith.constant dense<0.000000e+00> : vector<8xf32>
    %63 = vector.multi_reduction <add>, %62, %cst_25 [1] : vector<8x32xf32> to vector<8xf32>
    %64 = vector.shape_cast %63 : vector<8xf32> to vector<8x1xf32>
    %cst_26 = arith.constant 3.200000e+01 : f32
    %65 = vector.broadcast %cst_26 : f32 to vector<8x1xf32>
    %66 = arith.divf %64, %65 : vector<8x1xf32>
    %cst_27 = arith.constant 9.99999974E-6 : f32
    %67 = vector.broadcast %cst_27 : f32 to vector<8x1xf32>
    %68 = arith.addf %66, %67 : vector<8x1xf32>
    %69 = math.rsqrt %68 : vector<8x1xf32>
    %70 = vector.broadcast %69 : vector<8x1xf32> to vector<8x32xf32>
    %71 = arith.mulf %61, %70 : vector<8x32xf32>
    %c0_28 = arith.constant 0 : index
    %c0_29 = arith.constant 0 : index
    %72 = vector.load %arg7[%c0_28, %c0_29] : memref<1x32xf32, #tpu.memory_space<vmem>>, vector<1x32xf32>
    %73 = vector.broadcast %72 : vector<1x32xf32> to vector<8x32xf32>
    %74 = arith.mulf %71, %73 : vector<8x32xf32>
    %c0_30 = arith.constant 0 : index
    %c0_31 = arith.constant 0 : index
    %75 = vector.load %arg8[%c0_30, %c0_31] : memref<1x32xf32, #tpu.memory_space<vmem>>, vector<1x32xf32>
    %76 = vector.broadcast %75 : vector<1x32xf32> to vector<8x32xf32>
    %77 = arith.addf %74, %76 : vector<8x32xf32>
    %78 = vector.shape_cast %77 : vector<8x32xf32> to vector<1x8x32xf32>
    %c0_32 = arith.constant 0 : index
    %c0_33 = arith.constant 0 : index
    %c0_34 = arith.constant 0 : index
    %79 = vector.load %arg9[%c0_32, %c0_33, %c0_34] : memref<1x8x32xf32, #tpu.memory_space<vmem>>, vector<1x8x32xf32>
    tpu.vector_store %arg9[%c0_32, %c0_33, %c0_34], %78 {strides = array<i32>} : memref<1x8x32xf32, #tpu.memory_space<vmem>>, vector<1x8x32xf32>,
    return
  }
  func.func @transform_0(%arg0: i32) -> (i32, i32, i32) {
    %c0_i32 = arith.constant 0 : i32
    %c0_i32_0 = arith.constant 0 : i32
    %c0_i32_1 = arith.constant 0 : i32
    return %arg0, %c0_i32, %c0_i32_0 : i32, i32, i32
  }
  func.func @transform_1(%arg0: i32) -> (i32, i32, i32) {
    %c0_i32 = arith.constant 0 : i32
    %c0_i32_0 = arith.constant 0 : i32
    %c0_i32_1 = arith.constant 0 : i32
    return %arg0, %c0_i32, %c0_i32_0 : i32, i32, i32
  }
  func.func @transform_2(%arg0: i32) -> (i32, i32) {
    %c0_i32 = arith.constant 0 : i32
    %c0_i32_0 = arith.constant 0 : i32
    %c0_i32_1 = arith.constant 0 : i32
    return %c0_i32, %c0_i32_0 : i32, i32
  }
  func.func @transform_3(%arg0: i32) -> (i32, i32) {
    %c0_i32 = arith.constant 0 : i32
    %c0_i32_0 = arith.constant 0 : i32
    %c0_i32_1 = arith.constant 0 : i32
    return %c0_i32, %c0_i32_0 : i32, i32
  }
  func.func @transform_4(%arg0: i32) -> (i32, i32) {
    %c0_i32 = arith.constant 0 : i32
    %c0_i32_0 = arith.constant 0 : i32
    %c0_i32_1 = arith.constant 0 : i32
    return %c0_i32, %c0_i32_0 : i32, i32
  }
  func.func @transform_5(%arg0: i32) -> (i32, i32) {
    %c0_i32 = arith.constant 0 : i32
    %c0_i32_0 = arith.constant 0 : i32
    %c0_i32_1 = arith.constant 0 : i32
    return %c0_i32, %c0_i32_0 : i32, i32
  }
  func.func @transform_6(%arg0: i32) -> (i32, i32) {
    %c0_i32 = arith.constant 0 : i32
    %c0_i32_0 = arith.constant 0 : i32
    %c0_i32_1 = arith.constant 0 : i32
    return %c0_i32, %c0_i32_0 : i32, i32
  }
  func.func @transform_7(%arg0: i32) -> (i32, i32) {
    %c0_i32 = arith.constant 0 : i32
    %c0_i32_0 = arith.constant 0 : i32
    %c0_i32_1 = arith.constant 0 : i32
    return %c0_i32, %c0_i32_0 : i32, i32
  }
  func.func @transform_8(%arg0: i32) -> (i32, i32, i32) {
    %c0_i32 = arith.constant 0 : i32
    %c0_i32_0 = arith.constant 0 : i32
    %c0_i32_1 = arith.constant 0 : i32
    return %arg0, %c0_i32, %c0_i32_0 : i32, i32, i32
  }
  func.func @transform_9(%arg0: i32) -> (i32, i32, i32, i32) {
    %c0_i32 = arith.constant 0 : i32
    %c0_i32_0 = arith.constant 0 : i32
    %c0_i32_1 = arith.constant 0 : i32
    %c0_i32_2 = arith.constant 0 : i32
    return %arg0, %c0_i32, %c0_i32_0, %c0_i32_1 : i32, i32, i32, i32
  }
}

</mosaic_0001>

<llo_original>
// kernel: tpu_custom_call.1
$region0: #{tpu_custom_call.1}
  #allocation0 [shape = 'u32[]', space=smem, size = 0x4, offset = 0x4, fixed_abs, tag = 'smem constant byte address 0x4 - core index']
  #allocation1 [shape = 'u32[72,128]{1,0:T(1,128)}', space=vmem, size = 0x9000, scoped, tag = 'internal scratch']
  %s0 = inlined_call_operand.hbm [shape: f32[2,8,32], index: 0, kind: input, shape index: {}]
  %s1 = inlined_call_operand.hbm [shape: bf16[2,8,8], index: 1, kind: input, shape index: {}]
  %s2 = inlined_call_operand.hbm [shape: bf16[32,96], index: 2, kind: input, shape index: {}]
  %s3 = inlined_call_operand.vmem [shape: f32[1,96], index: 3, kind: input, shape index: {}]
  %s4 = inlined_call_operand.hbm [shape: bf16[32,32], index: 4, kind: input, shape index: {}]
  %s5 = inlined_call_operand.vmem [shape: f32[1,32], index: 5, kind: input, shape index: {}]
  %s6 = inlined_call_operand.vmem [shape: f32[1,32], index: 6, kind: input, shape index: {}]
  %s7 = inlined_call_operand.vmem [shape: f32[1,32], index: 7, kind: input, shape index: {}]
  %s8 = inlined_call_operand.hbm [shape: f32[2,8,32], index: 8, kind: output, shape index: {0}]
  %s9 = inlined_call_operand.hbm [shape: bf16[2,4,8,8], index: 9, kind: output, shape index: {1}]
  %10 = xla_tuple %s8, %s9
  %s11 = sld [smem:[#allocation0]]
  $region89: #{tpu_custom_call.1} parent=0
    _
  %s13 = ssub.s32 1, %s11
  %s14 = scalar_select 0, %s13, %s11
  $region1: #{tpu_custom_call.1} parent=0
    #allocation2 [shape = 'u8[8192]{0}', space=vmem, size = 0x2000, scoped, tag = 'input window, operand 0']
    #allocation3 [shape = 's32[2]{0}', space=sflag, size = 0x8, scoped, tag = 'scoped memory for tpu_custom_call.1']
    #allocation4 [shape = 's32[2]{0}', space=sflag, size = 0x8, scoped, tag = 'scoped memory for tpu_custom_call.1']
    #allocation5 [shape = 'u8[4096]{0}', space=vmem, size = 0x1000, scoped, tag = 'input window, operand 1']
    #allocation6 [shape = 's32[2]{0}', space=sflag, size = 0x8, scoped, tag = 'scoped memory for tpu_custom_call.1']
    #allocation7 [shape = 'u8[8192]{0}', space=vmem, size = 0x2000, scoped, tag = 'input window, operand 2, single buffered']
    #allocation8 [shape = 'u8[8192]{0}', space=vmem, size = 0x2000, scoped, tag = 'input window, operand 4, single buffered']
    #allocation9 [shape = 's32[1]{0}', space=sflag, size = 0x4, scoped, tag = 'scoped memory for tpu_custom_call.1']
    #allocation10 [shape = 'u8[8192]{0}', space=vmem, size = 0x2000, scoped, tag = 'output window, operand 0']
    #allocation11 [shape = 'u8[16384]{0}', space=vmem, size = 0x4000, scoped, tag = 'output window, operand 1']
    #allocation12 [shape = 's32[2]{0}', space=sflag, size = 0x8, scoped, tag = 'scoped memory for tpu_custom_call.1']
    %15 = vsyncpa [#allocation3], 0
    %s16 = scalar_lea.sflag [#allocation3], 1
    %17 = vsyncpa %s16, 0
    %18 = vsyncpa [#allocation6], 0
    %s19 = scalar_lea.sflag [#allocation6], 1
    %20 = vsyncpa %s19, 0
    %21 = vsyncpa [#allocation9], 0
    %22 = vsyncpa [#allocation4], 0
    %s23 = scalar_lea.sflag [#allocation4], 1
    %24 = vsyncpa %s23, 0
    %25 = vsyncpa [#allocation12], 0
    %s26 = scalar_lea.sflag [#allocation12], 1
    %27 = vsyncpa %s26, 0
    loop: start=0, step=1, limit=4
    $region2: #{tpu_custom_call.1} parent=1 // loop_pre_header
      _
    $region3: #{tpu_custom_call.1} parent=1 // loop_header
      %s29 = sphi 0, %s33
      %p30 = scmp.ge.s32.totalorder %s29, 4
      %s39 = sphi 0, %s41
      %s42 = sphi 0, %s39
      %s43 = sphi 0, %s42
      %s59 = sphi 0, %s43
      %s65 = sphi 0, %s67
      %s68 = sphi 0, %s65
      %s69 = sphi 0, %s68
      %s85 = sphi 0, %s69
      %s89 = sphi 0, %s89
      %s91 = sphi 0, %s89
      %s92 = sphi 0, %s91
      %s106 = sphi 0, %s92
      %s110 = sphi 0, %s110
      %s112 = sphi 0, %s110
      %s113 = sphi 0, %s112
      %s127 = sphi 0, %s113
      %s131 = sphi 0, %s131
      %s133 = sphi 0, %s131
      %s134 = sphi 0, %s133
      %s148 = sphi 0, %s134
      %s152 = sphi 0, %s152
      %s154 = sphi 0, %s152
      %s155 = sphi 0, %s154
      %s169 = sphi 0, %s155
      %s173 = sphi 0, %s173
      %s175 = sphi 0, %s173
      %s176 = sphi 0, %s175
      %s190 = sphi 0, %s176
      %s194 = sphi 0, %s194
      %s196 = sphi 0, %s194
      %s197 = sphi 0, %s196
      %s211 = sphi 0, %s197
      %s217 = sphi 0, %s219
      %s220 = sphi 0, %s217
      %s221 = sphi 0, %s220
      %s237 = sphi 0, %s221
      %s243 = sphi 0, %s245
      %s246 = sphi 0, %s243
      %s247 = sphi 0, %s246
      %s263 = sphi 0, %s247
    $region4: #{tpu_custom_call.1} parent=1 // loop_header_branch
      %32 = sbr.rel (%p30) target = $region8
    $region5: #{tpu_custom_call.1} parent=1 // loop_body
      %s34 = ssub.s32 %s29, 1
      %s35 = ssub.s32 %s29, 2
      %s36 = sadd.s32 %s29, 1
      %s37 = ssub.s32 %s29, %s36
      %p38 = scmp.eq.s32.totalorder %s37, 0
      %s40 = sadd.s32 %s39, 1
      %s41 = scalar_select %p38, %s39, %s40
      %p44 = pneg %p38
      %p45 = scmp.eq.s32.totalorder %s29, 1
      %p46 = por %p44, %p45
      %p47 = scmp.ne.s32.totalorder %s39, %s42
      %p48 = scmp.eq.s32.totalorder %s29, 0
      %p49 = por %p47, %p48
      %p50 = scmp.ne.s32.totalorder %s39, %s42
      %p51 = scmp.eq.s32.totalorder %s34, 1
      %p52 = por %p50, %p51
      %p53 = scmp.ne.s32.totalorder %s42, %s43
      %p54 = scmp.eq.s32.totalorder %s34, 0
      %p55 = por %p53, %p54
      %p56 = scmp.ne.s32.totalorder %s42, %s43
      %p57 = scmp.eq.s32.totalorder %s35, 1
      %p58 = por %p56, %p57
      %p60 = scmp.ne.s32.totalorder %s43, %s59
      %p61 = scmp.eq.s32.totalorder %s35, 0
      %p62 = por %p60, %p61
      %s63 = ssub.s32 %s29, %s36
      %p64 = scmp.eq.s32.totalorder %s63, 0
      %s66 = sadd.s32 %s65, 1
      %s67 = scalar_select %p64, %s65, %s66
      %p70 = pneg %p64
      %p71 = scmp.eq.s32.totalorder %s29, 1
      %p72 = por %p70, %p71
      %p73 = scmp.ne.s32.totalorder %s65, %s68
      %p74 = scmp.eq.s32.totalorder %s29, 0
      %p75 = por %p73, %p74
      %p76 = scmp.ne.s32.totalorder %s65, %s68
      %p77 = scmp.eq.s32.totalorder %s34, 1
      %p78 = por %p76, %p77
      %p79 = scmp.ne.s32.totalorder %s68, %s69
      %p80 = scmp.eq.s32.totalorder %s34, 0
      %p81 = por %p79, %p80
      %p82 = scmp.ne.s32.totalorder %s68, %s69
      %p83 = scmp.eq.s32.totalorder %s35, 1
      %p84 = por %p82, %p83
      %p86 = scmp.ne.s32.totalorder %s69, %s85
      %p87 = scmp.eq.s32.totalorder %s35, 0
      %p88 = por %p86, %p87
      %s90 = sadd.s32 %s89, 1
      %p93 = scmp.eq.s32.totalorder %s29, 1
      %p94 = scmp.ne.s32.totalorder %s89, %s91
      %p95 = scmp.eq.s32.totalorder %s29, 0
      %p96 = por %p94, %p95
      %p97 = scmp.ne.s32.totalorder %s89, %s91
      %p98 = scmp.eq.s32.totalorder %s34, 1
      %p99 = por %p97, %p98
      %p100 = scmp.ne.s32.totalorder %s91, %s92
      %p101 = scmp.eq.s32.totalorder %s34, 0
      %p102 = por %p100, %p101
      %p103 = scmp.ne.s32.totalorder %s91, %s92
      %p104 = scmp.eq.s32.totalorder %s35, 1
      %p105 = por %p103, %p104
      %p107 = scmp.ne.s32.totalorder %s92, %s106
      %p108 = scmp.eq.s32.totalorder %s35, 0
      %p109 = por %p107, %p108
      %s111 = sadd.s32 %s110, 1
      %p114 = scmp.eq.s32.totalorder %s29, 1
      %p115 = scmp.ne.s32.totalorder %s110, %s112
      %p116 = scmp.eq.s32.totalorder %s29, 0
      %p117 = por %p115, %p116
      %p118 = scmp.ne.s32.totalorder %s110, %s112
      %p119 = scmp.eq.s32.totalorder %s34, 1
      %p120 = por %p118, %p119
      %p121 = scmp.ne.s32.totalorder %s112, %s113
      %p122 = scmp.eq.s32.totalorder %s34, 0
      %p123 = por %p121, %p122
      %p124 = scmp.ne.s32.totalorder %s112, %s113
      %p125 = scmp.eq.s32.totalorder %s35, 1
      %p126 = por %p124, %p125
      %p128 = scmp.ne.s32.totalorder %s113, %s127
      %p129 = scmp.eq.s32.totalorder %s35, 0
      %p130 = por %p128, %p129
      %s132 = sadd.s32 %s131, 1
      %p135 = scmp.eq.s32.totalorder %s29, 1
      %p136 = scmp.ne.s32.totalorder %s131, %s133
      %p137 = scmp.eq.s32.totalorder %s29, 0
      %p138 = por %p136, %p137
      %p139 = scmp.ne.s32.totalorder %s131, %s133
      %p140 = scmp.eq.s32.totalorder %s34, 1
      %p141 = por %p139, %p140
      %p142 = scmp.ne.s32.totalorder %s133, %s134
      %p143 = scmp.eq.s32.totalorder %s34, 0
      %p144 = por %p142, %p143
      %p145 = scmp.ne.s32.totalorder %s133, %s134
      %p146 = scmp.eq.s32.totalorder %s35, 1
      %p147 = por %p145, %p146
      %p149 = scmp.ne.s32.totalorder %s134, %s148
      %p150 = scmp.eq.s32.totalorder %s35, 0
      %p151 = por %p149, %p150
      %s153 = sadd.s32 %s152, 1
      %p156 = scmp.eq.s32.totalorder %s29, 1
      %p157 = scmp.ne.s32.totalorder %s152, %s154
      %p158 = scmp.eq.s32.totalorder %s29, 0
      %p159 = por %p157, %p158
      %p160 = scmp.ne.s32.totalorder %s152, %s154
      %p161 = scmp.eq.s32.totalorder %s34, 1
      %p162 = por %p160, %p161
      %p163 = scmp.ne.s32.totalorder %s154, %s155
      %p164 = scmp.eq.s32.totalorder %s34, 0
      %p165 = por %p163, %p164
      %p166 = scmp.ne.s32.totalorder %s154, %s155
      %p167 = scmp.eq.s32.totalorder %s35, 1
      %p168 = por %p166, %p167
      %p170 = scmp.ne.s32.totalorder %s155, %s169
      %p171 = scmp.eq.s32.totalorder %s35, 0
      %p172 = por %p170, %p171
      %s174 = sadd.s32 %s173, 1
      %p177 = scmp.eq.s32.totalorder %s29, 1
      %p178 = scmp.ne.s32.totalorder %s173, %s175
      %p179 = scmp.eq.s32.totalorder %s29, 0
      %p180 = por %p178, %p179
      %p181 = scmp.ne.s32.totalorder %s173, %s175
      %p182 = scmp.eq.s32.totalorder %s34, 1
      %p183 = por %p181, %p182
      %p184 = scmp.ne.s32.totalorder %s175, %s176
      %p185 = scmp.eq.s32.totalorder %s34, 0
      %p186 = por %p184, %p185
      %p187 = scmp.ne.s32.totalorder %s175, %s176
      %p188 = scmp.eq.s32.totalorder %s35, 1
      %p189 = por %p187, %p188
      %p191 = scmp.ne.s32.totalorder %s176, %s190
      %p192 = scmp.eq.s32.totalorder %s35, 0
      %p193 = por %p191, %p192
      %s195 = sadd.s32 %s194, 1
      %p198 = scmp.eq.s32.totalorder %s29, 1
      %p199 = scmp.ne.s32.totalorder %s194, %s196
      %p200 = scmp.eq.s32.totalorder %s29, 0
      %p201 = por %p199, %p200
      %p202 = scmp.ne.s32.totalorder %s194, %s196
      %p203 = scmp.eq.s32.totalorder %s34, 1
      %p204 = por %p202, %p203
      %p205 = scmp.ne.s32.totalorder %s196, %s197
      %p206 = scmp.eq.s32.totalorder %s34, 0
      %p207 = por %p205, %p206
      %p208 = scmp.ne.s32.totalorder %s196, %s197
      %p209 = scmp.eq.s32.totalorder %s35, 1
      %p210 = por %p208, %p209
      %p212 = scmp.ne.s32.totalorder %s197, %s211
      %p213 = scmp.eq.s32.totalorder %s35, 0
      %p214 = por %p212, %p213
      %s215 = ssub.s32 %s29, %s36
      %p216 = scmp.eq.s32.totalorder %s215, 0
      %s218 = sadd.s32 %s217, 1
      %s219 = scalar_select %p216, %s217, %s218
      %p222 = pneg %p216
      %p223 = scmp.eq.s32.totalorder %s29, 1
      %p224 = por %p222, %p223
      %p225 = scmp.ne.s32.totalorder %s217, %s220
      %p226 = scmp.eq.s32.totalorder %s29, 0
      %p227 = por %p225, %p226
      %p228 = scmp.ne.s32.totalorder %s217, %s220
      %p229 = scmp.eq.s32.totalorder %s34, 1
      %p230 = por %p228, %p229
      %p231 = scmp.ne.s32.totalorder %s220, %s221
      %p232 = scmp.eq.s32.totalorder %s34, 0
      %p233 = por %p231, %p232
      %p234 = scmp.ne.s32.totalorder %s220, %s221
      %p235 = scmp.eq.s32.totalorder %s35, 1
      %p236 = por %p234, %p235
      %p238 = scmp.ne.s32.totalorder %s221, %s237
      %p239 = scmp.eq.s32.totalorder %s35, 0
      %p240 = por %p238, %p239
      %s241 = ssub.s32 %s29, %s36
      %p242 = scmp.eq.s32.totalorder %s241, 0
      %s244 = sadd.s32 %s243, 1
      %s245 = scalar_select %p242, %s243, %s244
      %p248 = pneg %p242
      %p249 = scmp.eq.s32.totalorder %s29, 1
      %p250 = por %p248, %p249
      %p251 = scmp.ne.s32.totalorder %s243, %s246
      %p252 = scmp.eq.s32.totalorder %s29, 0
      %p253 = por %p251, %p252
      %p254 = scmp.ne.s32.totalorder %s243, %s246
      %p255 = scmp.eq.s32.totalorder %s34, 1
      %p256 = por %p254, %p255
      %p257 = scmp.ne.s32.totalorder %s246, %s247
      %p258 = scmp.eq.s32.totalorder %s34, 0
      %p259 = por %p257, %p258
      %p260 = scmp.ne.s32.totalorder %s246, %s247
      %p261 = scmp.eq.s32.totalorder %s35, 1
      %p262 = por %p260, %p261
      %p264 = scmp.ne.s32.totalorder %s247, %s263
      %p265 = scmp.eq.s32.totalorder %s35, 0
      %p266 = por %p264, %p265
      %p267 = scmp.le.s32.totalorder 1, %s29
      %p268 = scmp.lt.s32.totalorder %s29, 3
      %p269 = pnand %p267, %p268
      %p270 = pneg %p269
      // Predicated region
      $region9: #{tpu_custom_call.1} parent=5 // pred_check
        _
      $region10: #{tpu_custom_call.1} parent=5 // pred_check_branch
        %272 = sbr.rel (%p269) target = $region12
      $region11: #{tpu_custom_call.1} parent=5 // pred_region
        %s273 = ssub.s32 %s29, 1
        // Predicated region
        $region13: #{tpu_custom_call.1} parent=11 // pred_check
          %p274 = pneg %p102
        $region14: #{tpu_custom_call.1} parent=11 // pred_check_branch
          %276 = sbr.rel (%p274) target = $region16
        $region15: #{tpu_custom_call.1} parent=11 // pred_region
          %278 = vsyncadd [#allocation6], 0
          %s279 = sshll.u32 %s2, 4
          %s280 = int_to_ptr.hbm [resolvable:$true] %s279
          %s281 = sshll.u32 [#allocation7], 4
          %s282 = int_to_ptr.vmem [resolvable:$true] %s281
          %287 = dma.hbm_to_vmem [thread:$0]  %s280, 256, %s282, [#allocation6], 64, 64, 4
        $region16: #{tpu_custom_call.1} parent=11 // pred_fallthru
          _
        // Predicated region
        $region17: #{tpu_custom_call.1} parent=11 // pred_check
          %p288 = pneg %p123
        $region18: #{tpu_custom_call.1} parent=11 // pred_check_branch
          %290 = sbr.rel (%p288) target = $region20
        $region19: #{tpu_custom_call.1} parent=11 // pred_region
          _
        $region20: #{tpu_custom_call.1} parent=11 // pred_fallthru
          _
        // Predicated region
        $region21: #{tpu_custom_call.1} parent=11 // pred_check
          %p291 = pneg %p144
        $region22: #{tpu_custom_call.1} parent=11 // pred_check_branch
          %293 = sbr.rel (%p291) target = $region24
        $region23: #{tpu_custom_call.1} parent=11 // pred_region
          %295 = vsyncadd [#allocation9], 0
          %s296 = sshll.u32 %s4, 4
          %s297 = int_to_ptr.hbm [resolvable:$true] %s296
          %s298 = sshll.u32 [#allocation8], 4
          %s299 = int_to_ptr.vmem [resolvable:$true] %s298
          %304 = dma.hbm_to_vmem [thread:$0]  %s297, 256, %s299, [#allocation9], 64, 64, 4
        $region24: #{tpu_custom_call.1} parent=11 // pred_fallthru
          _
        // Predicated region
        $region25: #{tpu_custom_call.1} parent=11 // pred_check
          %p305 = pneg %p165
        $region26: #{tpu_custom_call.1} parent=11 // pred_check_branch
          %307 = sbr.rel (%p305) target = $region28
        $region27: #{tpu_custom_call.1} parent=11 // pred_region
          _
        $region28: #{tpu_custom_call.1} parent=11 // pred_fallthru
          _
        // Predicated region
        $region29: #{tpu_custom_call.1} parent=11 // pred_check
          %p308 = pneg %p186
        $region30: #{tpu_custom_call.1} parent=11 // pred_check_branch
          %310 = sbr.rel (%p308) target = $region32
        $region31: #{tpu_custom_call.1} parent=11 // pred_region
          _
        $region32: #{tpu_custom_call.1} parent=11 // pred_fallthru
          _
        // Predicated region
        $region33: #{tpu_custom_call.1} parent=11 // pred_check
          %p311 = pneg %p207
        $region34: #{tpu_custom_call.1} parent=11 // pred_check_branch
          %313 = sbr.rel (%p311) target = $region36
        $region35: #{tpu_custom_call.1} parent=11 // pred_region
          _
        $region36: #{tpu_custom_call.1} parent=11 // pred_fallthru
          _
      $region12: #{tpu_custom_call.1} parent=5 // pred_fallthru
        _
      %p314 = scmp.lt.s32.totalorder %s29, 2
      // Predicated region
      $region37: #{tpu_custom_call.1} parent=5 // pred_check
        %p315 = pneg %p314
      $region38: #{tpu_custom_call.1} parent=5 // pred_check_branch
        %317 = sbr.rel (%p315) target = $region40
      $region39: #{tpu_custom_call.1} parent=5 // pred_region
        // Predicated region
        $region41: #{tpu_custom_call.1} parent=39 // pred_check
          %p318 = pneg %p49
        $region42: #{tpu_custom_call.1} parent=39 // pred_check_branch
          %320 = sbr.rel (%p318) target = $region44
        $region43: #{tpu_custom_call.1} parent=39 // pred_region
          %s321 = sand.u32 %s39, 1
          %s322 = scalar_lea.sflag [#allocation3], %s321
          %s323 = sand.u32 %s39, 1
          %s324 = smul.addr %s323, 8
          %s325 = scalar_lea.vmem [#allocation2], %s324
          %327 = vsyncadd %s322, 0
          %s328 = smul.addr %s29, 8
          %s329 = scalar_lea.hbm %s0, %s328
          %s331 = sshll.u32 %s329, 4
          %s332 = int_to_ptr.hbm [resolvable:$true] %s331
          %s333 = sshll.u32 %s325, 4
          %s334 = int_to_ptr.vmem [resolvable:$true] %s333
          %336 = dma.hbm_to_vmem [thread:$0]  %s332, 128, %s334, %s322
        $region44: #{tpu_custom_call.1} parent=39 // pred_fallthru
          _
        // Predicated region
        $region45: #{tpu_custom_call.1} parent=39 // pred_check
          %p337 = pneg %p75
        $region46: #{tpu_custom_call.1} parent=39 // pred_check_branch
          %339 = sbr.rel (%p337) target = $region48
        $region47: #{tpu_custom_call.1} parent=39 // pred_region
          %s340 = sand.u32 %s29, 1
          %s341 = scalar_lea.sflag [#allocation6], %s340
          %s342 = sand.u32 %s65, 1
          %s343 = smul.addr %s342, 4
          %s344 = scalar_lea.vmem [#allocation5], %s343
          %346 = vsyncadd %s341, 0
          %s347 = smul.addr %s29, 4
          %s348 = scalar_lea.hbm %s1, %s347
          %s350 = sshll.u32 %s348, 4
          %s351 = int_to_ptr.hbm [resolvable:$true] %s350
          %s352 = sshll.u32 %s344, 4
          %s353 = int_to_ptr.vmem [resolvable:$true] %s352
          %355 = dma.hbm_to_vmem [thread:$0]  %s351, 64, %s353, %s341
        $region48: #{tpu_custom_call.1} parent=39 // pred_fallthru
          _
      $region40: #{tpu_custom_call.1} parent=5 // pred_fallthru
        _
      %p356 = scmp.le.s32.totalorder 1, %s29
      %p357 = scmp.lt.s32.totalorder %s29, 3
      %p358 = pnand %p356, %p357
      %p359 = pneg %p358
      // Predicated region
      $region49: #{tpu_custom_call.1} parent=5 // pred_check
        _
      $region50: #{tpu_custom_call.1} parent=5 // pred_check_branch
        %361 = sbr.rel (%p358) target = $region52
      $region51: #{tpu_custom_call.1} parent=5 // pred_region
        %s362 = ssub.s32 %s29, 1
        %s363 = sand.u32 %s42, 1
        %s364 = scalar_lea.sflag [#allocation3], %s363
        %s365 = sand.u32 %s42, 1
        %s366 = smul.addr %s365, 8
        %s367 = scalar_lea.vmem [#allocation2], %s366
        // Predicated region
        $region53: #{tpu_custom_call.1} parent=51 // pred_check
          %p368 = pneg %p55
        $region54: #{tpu_custom_call.1} parent=51 // pred_check_branch
          %370 = sbr.rel (%p368) target = $region56
        $region55: #{tpu_custom_call.1} parent=51 // pred_region
          %372 = dma.done %s364, 128
        $region56: #{tpu_custom_call.1} parent=51 // pred_fallthru
          _
        %s373 = sand.u32 %s34, 1
        %s374 = scalar_lea.sflag [#allocation6], %s373
        %s375 = sand.u32 %s68, 1
        %s376 = smul.addr %s375, 4
        %s377 = scalar_lea.vmem [#allocation5], %s376
        // Predicated region
        $region57: #{tpu_custom_call.1} parent=51 // pred_check
          %p378 = pneg %p81
        $region58: #{tpu_custom_call.1} parent=51 // pred_check_branch
          %380 = sbr.rel (%p378) target = $region60
        $region59: #{tpu_custom_call.1} parent=51 // pred_region
          %382 = dma.done %s374, 64
        $region60: #{tpu_custom_call.1} parent=51 // pred_fallthru
          _
        // Predicated region
        $region61: #{tpu_custom_call.1} parent=51 // pred_check
          %p383 = pneg %p102
        $region62: #{tpu_custom_call.1} parent=51 // pred_check_branch
          %385 = sbr.rel (%p383) target = $region64
        $region63: #{tpu_custom_call.1} parent=51 // pred_region
          %387 = dma.done [#allocation6], 256
        $region64: #{tpu_custom_call.1} parent=51 // pred_fallthru
          _
        // Predicated region
        $region65: #{tpu_custom_call.1} parent=51 // pred_check
          %p388 = pneg %p144
        $region66: #{tpu_custom_call.1} parent=51 // pred_check_branch
          %390 = sbr.rel (%p388) target = $region68
        $region67: #{tpu_custom_call.1} parent=51 // pred_region
          %392 = dma.done [#allocation9], 256
        $region68: #{tpu_custom_call.1} parent=51 // pred_fallthru
          _
        %s393 = sand.u32 %s42, 1
        %s394 = scalar_lea.sflag [#allocation3], %s393
        %s395 = sand.u32 %s42, 1
        %s396 = smul.addr %s395, 8
        %s397 = scalar_lea.vmem [#allocation2], %s396
        %p398 = pneg %p55
        %p399 = pneg %p52
        %s400 = sand.u32 %s34, 1
        %s401 = scalar_lea.sflag [#allocation6], %s400
        %s402 = sand.u32 %s68, 1
        %s403 = smul.addr %s402, 4
        %s404 = scalar_lea.vmem [#allocation5], %s403
        %p405 = pneg %p81
        %p406 = pneg %p78
        %p407 = pneg %p102
        %p408 = pneg %p99
        %p409 = pneg %p123
        %p410 = pneg %p120
        %p411 = pneg %p144
        %p412 = pneg %p141
        %p413 = pneg %p165
        %p414 = pneg %p162
        %p415 = pneg %p186
        %p416 = pneg %p183
        %p417 = pneg %p207
        %p418 = pneg %p204
        %p419 = pneg %p233
        %p420 = pneg %p230
        %s421 = sand.u32 %s220, 1
        %s422 = scalar_lea.sflag [#allocation4], %s421
        %s423 = sand.u32 %s220, 1
        %s424 = smul.addr %s423, 8
        %s425 = scalar_lea.vmem [#allocation10], %s424
        %p426 = pneg %p259
        %p427 = pneg %p256
        %s428 = sand.u32 %s246, 1
        %s429 = scalar_lea.sflag [#allocation12], %s428
        %s430 = sand.u32 %s246, 1
        %s431 = smul.addr %s430, 16
        %s432 = scalar_lea.vmem [#allocation11], %s431
        %v434 = vld [vmem:[%s367] sm:$0xff]
        %v435 = vpack.c.bf16 %v434, %v434
        %v436 = vld [vmem:[#allocation7] sm:$0xf]
        %v437 = vld [vmem:[#allocation7 + $0x4] sm:$0xf]
        %v438 = vld [vmem:[#allocation7 + $0x8] sm:$0xf]
        %v439 = vld [vmem:[#allocation7 + $0xc] sm:$0xf]
        %v440 = vld [vmem:[%s3] sm:$0x1]
        %v442 = vperm.slane %v440, 0
        %v448 = vunpack.c.l.b16 %v436
        %v449 = vunpack.c.l.b16 %v437
        %v450 = vunpack.c.l.b16 %v438
        %v451 = vunpack.c.l.b16 %v439
        %v452 = vpack.c.b16 %v449, %v448
        %v453 = vpack.c.b16 %v451, %v450
        %vm456 = vcmask 261120
        %v458 = vsel %vm456, %v435, 0
        %460 = vmatpush.bf16.msra.mxu0 0
        %461 = vmatpush.bf16.msra.mxu0 0
        %462 = vmatpush.bf16.msra.mxu0 0
        %463 = vmatpush.bf16.msra.mxu0 0
        %464 = vmatpush.bf16.msra.mxu0 0
        %465 = vmatpush.bf16.msra.mxu0 0
        %466 = vmatpush.bf16.msra.mxu0 %v453
        %467 = vmatpush.bf16.msra.mxu0 %v452
        %468 = vmatmul.bf16.gmra.mxu0 %v458
        %v469 = vpop.f32.mrf.mxu0
        %v470 = vadd.f32 %v442, %v469
        %v471 = vpop.f32.mrf.mxu0
        %472 = vdwg.mxu0
        %474 = vrot.lane.b32.xlu0 %v470, 120
        %v475 = vpop.permute.xlu0 %474
        %477 = vrot.lane.b32.xlu0 %v470, 112
        %v478 = vpop.permute.xlu0 %477
        %480 = vrot.lane.b32.xlu0 %v470, 104
        %v481 = vpop.permute.xlu0 %480
        %v483 = vrot.slane %v478, 4
        %vm484 = vcmask 1047556
        %v485 = vsel %vm484, %v483, %v470
        %v486 = vrot.slane %v470, 4
        %v487 = vsel %vm484, %v478, %v486
        %v489 = vunpack.c.l.s4 1983009808
        %v490 = vunpack.c.0.s8 %v489
        %v491 = vperm.slane %v485, %v490
        %v493 = vunpack.c.l.s4 1983009808
        %v494 = vunpack.c.0.s8 %v493
        %v495 = vperm.slane %v487, %v494
        %v496 = vrot.slane %v481, 4
        %v497 = vsel %vm484, %v496, %v475
        %v498 = vrot.slane %v475, 4
        %v499 = vsel %vm484, %v481, %v498
        %v501 = vunpack.c.l.s4 1983009808
        %v502 = vunpack.c.0.s8 %v501
        %v503 = vperm.slane %v497, %v502
        %v505 = vunpack.c.l.s4 1983009808
        %v506 = vunpack.c.0.s8 %v505
        %v507 = vperm.slane %v499, %v506
        %v508 = vrot.slane %v503, 4
        %v509 = vsel %vm484, %v508, %v491
        %v510 = vrot.slane %v491, 4
        %v511 = vsel %vm484, %v503, %v510
        %v513 = vunpack.c.l.s4 1934713408
        %v514 = vunpack.c.0.s8 %v513
        %v515 = vperm.slane %v509, %v514
        %v517 = vunpack.c.l.s4 1934713408
        %v518 = vunpack.c.0.s8 %v517
        %v519 = vperm.slane %v511, %v518
        %v520 = vrot.slane %v507, 4
        %v521 = vsel %vm484, %v520, %v495
        %v522 = vrot.slane %v495, 4
        %v523 = vsel %vm484, %v507, %v522
        %v525 = vunpack.c.l.s4 1934713408
        %v526 = vunpack.c.0.s8 %v525
        %v527 = vperm.slane %v521, %v526
        %v529 = vunpack.c.l.s4 1934713408
        %v530 = vunpack.c.0.s8 %v529
        %v531 = vperm.slane %v523, %v530
        %v532 = vrot.slane %v515, 4
        %v533 = vsel %vm484, 0.0, %v532
        %v534 = vrot.slane %v519, 4
        %v535 = vsel %vm484, 0.0, %v534
        %v536 = vrot.slane %v527, 4
        %v537 = vsel %vm484, 0.0, %v536
        %v538 = vrot.slane %v531, 4
        %v539 = vsel %vm484, 0.0, %v538
        %v540 = vsel %vm484, %v534, %v515
        %v542 = vunpack.c.l.s4 1983009808
        %v543 = vunpack.c.0.s8 %v542
        %v544 = vperm.slane %v540, %v543
        %v545 = vrot.slane %v535, 4
        %v546 = vsel %vm484, %v545, %v533
        %v548 = vunpack.c.l.s4 1983009808
        %v549 = vunpack.c.0.s8 %v548
        %v550 = vperm.slane %v546, %v549
        %v551 = vsel %vm484, %v538, %v527
        %v553 = vunpack.c.l.s4 1983009808
        %v554 = vunpack.c.0.s8 %v553
        %v555 = vperm.slane %v551, %v554
        %v556 = vrot.slane %v539, 4
        %v557 = vsel %vm484, %v556, %v537
        %v559 = vunpack.c.l.s4 1983009808
        %v560 = vunpack.c.0.s8 %v559
        %v561 = vperm.slane %v557, %v560
        %v562 = vrot.slane %v550, 4
        %v563 = vsel %vm484, %v562, %v544
        %v564 = vrot.slane %v544, 4
        %v565 = vsel %vm484, %v550, %v564
        %v567 = vunpack.c.l.s4 1934713408
        %v568 = vunpack.c.0.s8 %v567
        %v569 = vperm.slane %v563, %v568
        %v571 = vunpack.c.l.s4 1934713408
        %v572 = vunpack.c.0.s8 %v571
        %v573 = vperm.slane %v565, %v572
        %v574 = vrot.slane %v561, 4
        %v575 = vsel %vm484, %v574, %v555
        %v576 = vrot.slane %v555, 4
        %v577 = vsel %vm484, %v561, %v576
        %v579 = vunpack.c.l.s4 1934713408
        %v580 = vunpack.c.0.s8 %v579
        %v581 = vperm.slane %v575, %v580
        %v583 = vunpack.c.l.s4 1934713408
        %v584 = vunpack.c.0.s8 %v583
        %v585 = vperm.slane %v577, %v584
        %v586 = vrot.slane %v581, 4
        %v587 = vsel %vm484, %v586, %v569
        %v588 = vrot.slane %v569, 4
        %v589 = vsel %vm484, %v581, %v588
        %v590 = vrot.slane %v585, 4
        %v591 = vsel %vm484, %v590, %v573
        %v592 = vrot.slane %v573, 4
        %v593 = vsel %vm484, %v585, %v592
        %594 = vrot.lane.b32.xlu0 %v470, 96
        %v595 = vpop.permute.xlu0 %594
        %596 = vrot.lane.b32.xlu0 %v475, 96
        %v597 = vpop.permute.xlu0 %596
        %598 = vrot.lane.b32.xlu0 %v478, 96
        %v599 = vpop.permute.xlu0 %598
        %600 = vrot.lane.b32.xlu0 %v481, 96
        %v601 = vpop.permute.xlu0 %600
        %v606 = vrot.slane %v599, 4
        %v607 = vsel %vm484, %v606, %v595
        %v608 = vrot.slane %v595, 4
        %v609 = vsel %vm484, %v599, %v608
        %v611 = vunpack.c.l.s4 1983009808
        %v612 = vunpack.c.0.s8 %v611
        %v613 = vperm.slane %v607, %v612
        %v615 = vunpack.c.l.s4 1983009808
        %v616 = vunpack.c.0.s8 %v615
        %v617 = vperm.slane %v609, %v616
        %v618 = vrot.slane %v601, 4
        %v619 = vsel %vm484, %v618, %v597
        %v620 = vrot.slane %v597, 4
        %v621 = vsel %vm484, %v601, %v620
        %v623 = vunpack.c.l.s4 1983009808
        %v624 = vunpack.c.0.s8 %v623
        %v625 = vperm.slane %v619, %v624
        %v627 = vunpack.c.l.s4 1983009808
        %v628 = vunpack.c.0.s8 %v627
        %v629 = vperm.slane %v621, %v628
        %v630 = vrot.slane %v625, 4
        %v631 = vsel %vm484, %v630, %v613
        %v632 = vrot.slane %v613, 4
        %v633 = vsel %vm484, %v625, %v632
        %v635 = vunpack.c.l.s4 1934713408
        %v636 = vunpack.c.0.s8 %v635
        %v637 = vperm.slane %v631, %v636
        %v639 = vunpack.c.l.s4 1934713408
        %v640 = vunpack.c.0.s8 %v639
        %v641 = vperm.slane %v633, %v640
        %v642 = vrot.slane %v629, 4
        %v643 = vsel %vm484, %v642, %v617
        %v644 = vrot.slane %v617, 4
        %v645 = vsel %vm484, %v629, %v644
        %v647 = vunpack.c.l.s4 1934713408
        %v648 = vunpack.c.0.s8 %v647
        %v649 = vperm.slane %v643, %v648
        %v651 = vunpack.c.l.s4 1934713408
        %v652 = vunpack.c.0.s8 %v651
        %v653 = vperm.slane %v645, %v652
        %v654 = vrot.slane %v637, 4
        %v655 = vsel %vm484, 0.0, %v654
        %v656 = vrot.slane %v641, 4
        %v657 = vsel %vm484, 0.0, %v656
        %v658 = vrot.slane %v649, 4
        %v659 = vsel %vm484, 0.0, %v658
        %v660 = vrot.slane %v653, 4
        %v661 = vsel %vm484, 0.0, %v660
        %v662 = vsel %vm484, %v656, %v637
        %v664 = vunpack.c.l.s4 1983009808
        %v665 = vunpack.c.0.s8 %v664
        %v666 = vperm.slane %v662, %v665
        %v667 = vrot.slane %v657, 4
        %v668 = vsel %vm484, %v667, %v655
        %v670 = vunpack.c.l.s4 1983009808
        %v671 = vunpack.c.0.s8 %v670
        %v672 = vperm.slane %v668, %v671
        %v673 = vsel %vm484, %v660, %v649
        %v675 = vunpack.c.l.s4 1983009808
        %v676 = vunpack.c.0.s8 %v675
        %v677 = vperm.slane %v673, %v676
        %v678 = vrot.slane %v661, 4
        %v679 = vsel %vm484, %v678, %v659
        %v681 = vunpack.c.l.s4 1983009808
        %v682 = vunpack.c.0.s8 %v681
        %v683 = vperm.slane %v679, %v682
        %v684 = vrot.slane %v672, 4
        %v685 = vsel %vm484, %v684, %v666
        %v686 = vrot.slane %v666, 4
        %v687 = vsel %vm484, %v672, %v686
        %v689 = vunpack.c.l.s4 1934713408
        %v690 = vunpack.c.0.s8 %v689
        %v691 = vperm.slane %v685, %v690
        %v693 = vunpack.c.l.s4 1934713408
        %v694 = vunpack.c.0.s8 %v693
        %v695 = vperm.slane %v687, %v694
        %v696 = vrot.slane %v683, 4
        %v697 = vsel %vm484, %v696, %v677
        %v698 = vrot.slane %v677, 4
        %v699 = vsel %vm484, %v683, %v698
        %v701 = vunpack.c.l.s4 1934713408
        %v702 = vunpack.c.0.s8 %v701
        %v703 = vperm.slane %v697, %v702
        %v705 = vunpack.c.l.s4 1934713408
        %v706 = vunpack.c.0.s8 %v705
        %v707 = vperm.slane %v699, %v706
        %v708 = vrot.slane %v703, 4
        %v709 = vsel %vm484, %v708, %v691
        %v710 = vrot.slane %v691, 4
        %v711 = vsel %vm484, %v703, %v710
        %v712 = vrot.slane %v707, 4
        %v713 = vsel %vm484, %v712, %v695
        %v714 = vrot.slane %v695, 4
        %v715 = vsel %vm484, %v707, %v714
        %716 = vrot.lane.b32.xlu0 %v470, 64
        %v717 = vpop.permute.xlu0 %716
        %718 = vrot.lane.b32.xlu0 %v475, 64
        %v719 = vpop.permute.xlu0 %718
        %720 = vrot.lane.b32.xlu0 %v478, 64
        %v721 = vpop.permute.xlu0 %720
        %722 = vrot.lane.b32.xlu0 %v481, 64
        %v723 = vpop.permute.xlu0 %722
        %v728 = vrot.slane %v721, 4
        %v729 = vsel %vm484, %v728, %v717
        %v730 = vrot.slane %v717, 4
        %v731 = vsel %vm484, %v721, %v730
        %v733 = vunpack.c.l.s4 1983009808
        %v734 = vunpack.c.0.s8 %v733
        %v735 = vperm.slane %v729, %v734
        %v737 = vunpack.c.l.s4 1983009808
        %v738 = vunpack.c.0.s8 %v737
        %v739 = vperm.slane %v731, %v738
        %v740 = vrot.slane %v723, 4
        %v741 = vsel %vm484, %v740, %v719
        %v742 = vrot.slane %v719, 4
        %v743 = vsel %vm484, %v723, %v742
        %v745 = vunpack.c.l.s4 1983009808
        %v746 = vunpack.c.0.s8 %v745
        %v747 = vperm.slane %v741, %v746
        %v749 = vunpack.c.l.s4 1983009808
        %v750 = vunpack.c.0.s8 %v749
        %v751 = vperm.slane %v743, %v750
        %v752 = vrot.slane %v747, 4
        %v753 = vsel %vm484, %v752, %v735
        %v754 = vrot.slane %v735, 4
        %v755 = vsel %vm484, %v747, %v754
        %v757 = vunpack.c.l.s4 1934713408
        %v758 = vunpack.c.0.s8 %v757
        %v759 = vperm.slane %v753, %v758
        %v761 = vunpack.c.l.s4 1934713408
        %v762 = vunpack.c.0.s8 %v761
        %v763 = vperm.slane %v755, %v762
        %v764 = vrot.slane %v751, 4
        %v765 = vsel %vm484, %v764, %v739
        %v766 = vrot.slane %v739, 4
        %v767 = vsel %vm484, %v751, %v766
        %v769 = vunpack.c.l.s4 1934713408
        %v770 = vunpack.c.0.s8 %v769
        %v771 = vperm.slane %v765, %v770
        %v773 = vunpack.c.l.s4 1934713408
        %v774 = vunpack.c.0.s8 %v773
        %v775 = vperm.slane %v767, %v774
        %v776 = vrot.slane %v759, 4
        %v777 = vsel %vm484, 0.0, %v776
        %v778 = vrot.slane %v763, 4
        %v779 = vsel %vm484, 0.0, %v778
        %v780 = vrot.slane %v771, 4
        %v781 = vsel %vm484, 0.0, %v780
        %v782 = vrot.slane %v775, 4
        %v783 = vsel %vm484, 0.0, %v782
        %v784 = vsel %vm484, %v778, %v759
        %v786 = vunpack.c.l.s4 1983009808
        %v787 = vunpack.c.0.s8 %v786
        %v788 = vperm.slane %v784, %v787
        %v789 = vrot.slane %v779, 4
        %v790 = vsel %vm484, %v789, %v777
        %v792 = vunpack.c.l.s4 1983009808
        %v793 = vunpack.c.0.s8 %v792
        %v794 = vperm.slane %v790, %v793
        %v795 = vsel %vm484, %v782, %v771
        %v797 = vunpack.c.l.s4 1983009808
        %v798 = vunpack.c.0.s8 %v797
        %v799 = vperm.slane %v795, %v798
        %v800 = vrot.slane %v783, 4
        %v801 = vsel %vm484, %v800, %v781
        %v803 = vunpack.c.l.s4 1983009808
        %v804 = vunpack.c.0.s8 %v803
        %v805 = vperm.slane %v801, %v804
        %v806 = vrot.slane %v794, 4
        %v807 = vsel %vm484, %v806, %v788
        %v808 = vrot.slane %v788, 4
        %v809 = vsel %vm484, %v794, %v808
        %v811 = vunpack.c.l.s4 1934713408
        %v812 = vunpack.c.0.s8 %v811
        %v813 = vperm.slane %v807, %v812
        %v815 = vunpack.c.l.s4 1934713408
        %v816 = vunpack.c.0.s8 %v815
        %v817 = vperm.slane %v809, %v816
        %v818 = vrot.slane %v805, 4
        %v819 = vsel %vm484, %v818, %v799
        %v820 = vrot.slane %v799, 4
        %v821 = vsel %vm484, %v805, %v820
        %v823 = vunpack.c.l.s4 1934713408
        %v824 = vunpack.c.0.s8 %v823
        %v825 = vperm.slane %v819, %v824
        %v827 = vunpack.c.l.s4 1934713408
        %v828 = vunpack.c.0.s8 %v827
        %v829 = vperm.slane %v821, %v828
        %v830 = vrot.slane %v825, 4
        %v831 = vsel %vm484, %v830, %v813
        %v832 = vrot.slane %v813, 4
        %v833 = vsel %vm484, %v825, %v832
        %v834 = vrot.slane %v829, 4
        %v835 = vsel %vm484, %v834, %v817
        %v836 = vrot.slane %v817, 4
        %v837 = vsel %vm484, %v829, %v836
        %v838 = vpack.c.bf16 %v587, %v587
        %v839 = vpack.c.bf16 %v589, %v589
        %v840 = vpack.c.bf16 %v591, %v591
        %v841 = vpack.c.bf16 %v593, %v593
        %v842 = vpack.c.bf16 %v709, %v709
        %v843 = vpack.c.bf16 %v711, %v711
        %v844 = vpack.c.bf16 %v713, %v713
        %v845 = vpack.c.bf16 %v715, %v715
        %vm846 = vcmask 64512
        %v848 = vsel %vm846, %v838, 0
        %v851 = vsel %vm846, %v842, 0
        %853 = vmatpush.bf16.xpose.msra.mxu0 0
        %854 = vmatpush.bf16.xpose.msra.mxu0 0
        %855 = vmatpush.bf16.xpose.msra.mxu0 0
        %856 = vmatpush.bf16.xpose.msra.mxu0 0
        %857 = vmatpush.bf16.xpose.msra.mxu0 0
        %858 = vmatpush.bf16.xpose.msra.mxu0 0
        %859 = vmatpush.bf16.xpose.msra.mxu0 0
        %860 = vmatpush.bf16.xpose.msra.mxu0 %v851
        %861 = vmatmul.bf16.gmra.mxu0 %v848
        %v862 = vpop.f32.mrf.mxu0
        %v863 = vadd.f32 0.0, %v862
        %v864 = vpop.f32.mrf.mxu0
        %865 = vdwg.mxu0
        %v867 = vsel %vm846, %v839, 0
        %v870 = vsel %vm846, %v843, 0
        %872 = vmatpush.bf16.xpose.msra.mxu0 0
        %873 = vmatpush.bf16.xpose.msra.mxu0 0
        %874 = vmatpush.bf16.xpose.msra.mxu0 0
        %875 = vmatpush.bf16.xpose.msra.mxu0 0
        %876 = vmatpush.bf16.xpose.msra.mxu0 0
        %877 = vmatpush.bf16.xpose.msra.mxu0 0
        %878 = vmatpush.bf16.xpose.msra.mxu0 0
        %879 = vmatpush.bf16.xpose.msra.mxu0 %v870
        %880 = vmatmul.bf16.gmra.mxu0 %v867
        %v881 = vpop.f32.mrf.mxu0
        %v882 = vadd.f32 0.0, %v881
        %v883 = vpop.f32.mrf.mxu0
        %884 = vdwg.mxu0
        %v886 = vsel %vm846, %v840, 0
        %v889 = vsel %vm846, %v844, 0
        %891 = vmatpush.bf16.xpose.msra.mxu0 0
        %892 = vmatpush.bf16.xpose.msra.mxu0 0
        %893 = vmatpush.bf16.xpose.msra.mxu0 0
        %894 = vmatpush.bf16.xpose.msra.mxu0 0
        %895 = vmatpush.bf16.xpose.msra.mxu0 0
        %896 = vmatpush.bf16.xpose.msra.mxu0 0
        %897 = vmatpush.bf16.xpose.msra.mxu0 0
        %898 = vmatpush.bf16.xpose.msra.mxu0 %v889
        %899 = vmatmul.bf16.gmra.mxu0 %v886
        %v900 = vpop.f32.mrf.mxu0
        %v901 = vadd.f32 0.0, %v900
        %v902 = vpop.f32.mrf.mxu0
        %903 = vdwg.mxu0
        %v905 = vsel %vm846, %v841, 0
        %v908 = vsel %vm846, %v845, 0
        %910 = vmatpush.bf16.xpose.msra.mxu0 0
        %911 = vmatpush.bf16.xpose.msra.mxu0 0
        %912 = vmatpush.bf16.xpose.msra.mxu0 0
        %913 = vmatpush.bf16.xpose.msra.mxu0 0
        %914 = vmatpush.bf16.xpose.msra.mxu0 0
        %915 = vmatpush.bf16.xpose.msra.mxu0 0
        %916 = vmatpush.bf16.xpose.msra.mxu0 0
        %917 = vmatpush.bf16.xpose.msra.mxu0 %v908
        %918 = vmatmul.bf16.gmra.mxu0 %v905
        %v919 = vpop.f32.mrf.mxu0
        %v920 = vadd.f32 0.0, %v919
        %v921 = vpop.f32.mrf.mxu0
        %922 = vdwg.mxu0
        %v923 = vld [vmem:[%s377] sm:$0xf]
        %v924 = vunpack.c.l.bf16 %v923
        %v925 = vadd.f32 %v863, %v924
        %v926 = vadd.f32 %v882, %v924
        %v927 = vadd.f32 %v901, %v924
        %v928 = vadd.f32 %v920, %v924
        %v929 = vsel %vm846, %v925, -inf
        %930 = vmax.xlane.f32.xlu0 %v929
        %v931 = vpop.xlane.xlu0 %930
        %v932 = vsel %vm846, %v926, -inf
        %933 = vmax.xlane.f32.xlu0 %v932
        %v934 = vpop.xlane.xlu0 %933
        %v935 = vsel %vm846, %v927, -inf
        %936 = vmax.xlane.f32.xlu0 %v935
        %v937 = vpop.xlane.xlu0 %936
        %v938 = vsel %vm846, %v928, -inf
        %939 = vmax.xlane.f32.xlu0 %v938
        %v940 = vpop.xlane.xlu0 %939
        %v941 = vsub.f32 %v925, %v931
        %v942 = vsub.f32 %v926, %v934
        %v943 = vsub.f32 %v927, %v937
        %v944 = vsub.f32 %v928, %v940
        %v945 = vmul.f32 %v941, 1.442695
        %v946 = vpow.pop %v945
        %v947 = vmul.f32 %v942, 1.442695
        %v948 = vpow.pop %v947
        %v949 = vmul.f32 %v943, 1.442695
        %v950 = vpow.pop %v949
        %v951 = vmul.f32 %v944, 1.442695
        %v952 = vpow.pop %v951
        %v953 = vsel %vm846, %v946, 0.0
        %954 = vadd.xlane.f32.xlu0 %v953
        %v955 = vpop.xlane.xlu0 %954
        %v956 = vsel %vm846, %v948, 0.0
        %957 = vadd.xlane.f32.xlu0 %v956
        %v958 = vpop.xlane.xlu0 %957
        %v959 = vsel %vm846, %v950, 0.0
        %960 = vadd.xlane.f32.xlu0 %v959
        %v961 = vpop.xlane.xlu0 %960
        %v962 = vsel %vm846, %v952, 0.0
        %963 = vadd.xlane.f32.xlu0 %v962
        %v964 = vpop.xlane.xlu0 %963
        %v965 = vrcp.pop %v955
        %v966 = vmul.f32 %v955, %v965
        %v967 = vsub.f32 1.0, %v966
        %v968 = vmul.f32 %v965, %v967
        %v969 = vadd.f32 %v965, %v968
        %vm970 = vweird.f32 %v955
        %vm971 = vweird.f32 %v965
        %vm972 = vmor %vm970, %vm971
        %v973 = vsel %vm972, %v965, %v969
        %v974 = vand.u32 2147483647, %v955
        %vm975 = vcmp.eq.f32.partialorder %v974, 8.507059e+37
        %v976 = vand.u32 %v955, 2147483648
        %v977 = vor.u32 1.1754944e-38, %v976
        %v978 = vsel %vm975, %v977, %v973
        %v979 = vmul.f32 %v946, %v978
        %v980 = vrcp.pop %v958
        %v981 = vmul.f32 %v958, %v980
        %v982 = vsub.f32 1.0, %v981
        %v983 = vmul.f32 %v980, %v982
        %v984 = vadd.f32 %v980, %v983
        %vm985 = vweird.f32 %v958
        %vm986 = vweird.f32 %v980
        %vm987 = vmor %vm985, %vm986
        %v988 = vsel %vm987, %v980, %v984
        %v989 = vand.u32 2147483647, %v958
        %vm990 = vcmp.eq.f32.partialorder %v989, 8.507059e+37
        %v991 = vand.u32 %v958, 2147483648
        %v992 = vor.u32 1.1754944e-38, %v991
        %v993 = vsel %vm990, %v992, %v988
        %v994 = vmul.f32 %v948, %v993
        %v995 = vrcp.pop %v961
        %v996 = vmul.f32 %v961, %v995
        %v997 = vsub.f32 1.0, %v996
        %v998 = vmul.f32 %v995, %v997
        %v999 = vadd.f32 %v995, %v998
        %vm1000 = vweird.f32 %v961
        %vm1001 = vweird.f32 %v995
        %vm1002 = vmor %vm1000, %vm1001
        %v1003 = vsel %vm1002, %v995, %v999
        %v1004 = vand.u32 2147483647, %v961
        %vm1005 = vcmp.eq.f32.partialorder %v1004, 8.507059e+37
        %v1006 = vand.u32 %v961, 2147483648
        %v1007 = vor.u32 1.1754944e-38, %v1006
        %v1008 = vsel %vm1005, %v1007, %v1003
        %v1009 = vmul.f32 %v950, %v1008
        %v1010 = vrcp.pop %v964
        %v1011 = vmul.f32 %v964, %v1010
        %v1012 = vsub.f32 1.0, %v1011
        %v1013 = vmul.f32 %v1010, %v1012
        %v1014 = vadd.f32 %v1010, %v1013
        %vm1015 = vweird.f32 %v964
        %vm1016 = vweird.f32 %v1010
        %vm1017 = vmor %vm1015, %vm1016
        %v1018 = vsel %vm1017, %v1010, %v1014
        %v1019 = vand.u32 2147483647, %v964
        %vm1020 = vcmp.eq.f32.partialorder %v1019, 8.507059e+37
        %v1021 = vand.u32 %v964, 2147483648
        %v1022 = vor.u32 1.1754944e-38, %v1021
        %v1023 = vsel %vm1020, %v1022, %v1018
        %v1024 = vmul.f32 %v952, %v1023
        %v1025 = vpack.c.bf16 %v979, %v979
        %v1026 = vpack.c.bf16 %v994, %v994
        %v1027 = vpack.c.bf16 %v1009, %v1009
        %v1028 = vpack.c.bf16 %v1024, %v1024
        %vm1029 = vcmask 60416
        %1030 = vst.msk [vmem:[%s432] sm:$0xf] %vm1029, %v1025
        %1031 = vst.msk [vmem:[%s432 + $0x4] sm:$0xf] %vm1029, %v1026
        %1032 = vst.msk [vmem:[%s432 + $0x8] sm:$0xf] %vm1029, %v1027
        %1033 = vst.msk [vmem:[%s432 + $0xc] sm:$0xf] %vm1029, %v1028
        %v1034 = vpack.c.bf16 %v831, %v831
        %v1035 = vpack.c.bf16 %v833, %v833
        %v1036 = vpack.c.bf16 %v835, %v835
        %v1037 = vpack.c.bf16 %v837, %v837
        %v1039 = vsel %vm846, %v1025, 0
        %vm1041 = vcmask 1043456
        %v1043 = vsel %vm1041, %v1034, 0
        %1045 = vmatpush.bf16.msra.mxu0 0
        %1046 = vmatpush.bf16.msra.mxu0 0
        %1047 = vmatpush.bf16.msra.mxu0 0
        %1048 = vmatpush.bf16.msra.mxu0 0
        %1049 = vmatpush.bf16.msra.mxu0 0
        %1050 = vmatpush.bf16.msra.mxu0 0
        %1051 = vmatpush.bf16.msra.mxu0 0
        %1052 = vmatpush.bf16.msra.mxu0 %v1043
        %1053 = vmatmul.bf16.gmra.mxu0 %v1039
        %v1054 = vpop.f32.mrf.mxu0
        %v1055 = vadd.f32 0.0, %v1054
        %v1056 = vpop.f32.mrf.mxu0
        %1057 = vdwg.mxu0
        %v1059 = vsel %vm846, %v1026, 0
        %v1062 = vsel %vm1041, %v1035, 0
        %1064 = vmatpush.bf16.msra.mxu0 0
        %1065 = vmatpush.bf16.msra.mxu0 0
        %1066 = vmatpush.bf16.msra.mxu0 0
        %1067 = vmatpush.bf16.msra.mxu0 0
        %1068 = vmatpush.bf16.msra.mxu0 0
        %1069 = vmatpush.bf16.msra.mxu0 0
        %1070 = vmatpush.bf16.msra.mxu0 0
        %1071 = vmatpush.bf16.msra.mxu0 %v1062
        %1072 = vmatmul.bf16.gmra.mxu0 %v1059
        %v1073 = vpop.f32.mrf.mxu0
        %v1074 = vadd.f32 0.0, %v1073
        %v1075 = vpop.f32.mrf.mxu0
        %1076 = vdwg.mxu0
        %v1078 = vsel %vm846, %v1027, 0
        %v1081 = vsel %vm1041, %v1036, 0
        %1083 = vmatpush.bf16.msra.mxu0 0
        %1084 = vmatpush.bf16.msra.mxu0 0
        %1085 = vmatpush.bf16.msra.mxu0 0
        %1086 = vmatpush.bf16.msra.mxu0 0
        %1087 = vmatpush.bf16.msra.mxu0 0
        %1088 = vmatpush.bf16.msra.mxu0 0
        %1089 = vmatpush.bf16.msra.mxu0 0
        %1090 = vmatpush.bf16.msra.mxu0 %v1081
        %1091 = vmatmul.bf16.gmra.mxu0 %v1078
        %v1092 = vpop.f32.mrf.mxu0
        %v1093 = vadd.f32 0.0, %v1092
        %v1094 = vpop.f32.mrf.mxu0
        %1095 = vdwg.mxu0
        %v1097 = vsel %vm846, %v1028, 0
        %v1100 = vsel %vm1041, %v1037, 0
        %1102 = vmatpush.bf16.msra.mxu0 0
        %1103 = vmatpush.bf16.msra.mxu0 0
        %1104 = vmatpush.bf16.msra.mxu0 0
        %1105 = vmatpush.bf16.msra.mxu0 0
        %1106 = vmatpush.bf16.msra.mxu0 0
        %1107 = vmatpush.bf16.msra.mxu0 0
        %1108 = vmatpush.bf16.msra.mxu0 0
        %1109 = vmatpush.bf16.msra.mxu0 %v1100
        %1110 = vmatmul.bf16.gmra.mxu0 %v1097
        %v1111 = vpop.f32.mrf.mxu0
        %v1112 = vadd.f32 0.0, %v1111
        %v1113 = vpop.f32.mrf.mxu0
        %1114 = vdwg.mxu0
        %v1115 = vrot.slane %v1093, 4
        %v1116 = vsel %vm484, %v1115, %v1055
        %v1117 = vrot.slane %v1055, 4
        %v1118 = vsel %vm484, %v1093, %v1117
        %v1120 = vunpack.c.l.s4 1983009808
        %v1121 = vunpack.c.0.s8 %v1120
        %v1122 = vperm.slane %v1116, %v1121
        %v1124 = vunpack.c.l.s4 1983009808
        %v1125 = vunpack.c.0.s8 %v1124
        %v1126 = vperm.slane %v1118, %v1125
        %v1127 = vrot.slane %v1112, 4
        %v1128 = vsel %vm484, %v1127, %v1074
        %v1129 = vrot.slane %v1074, 4
        %v1130 = vsel %vm484, %v1112, %v1129
        %v1132 = vunpack.c.l.s4 1983009808
        %v1133 = vunpack.c.0.s8 %v1132
        %v1134 = vperm.slane %v1128, %v1133
        %v1136 = vunpack.c.l.s4 1983009808
        %v1137 = vunpack.c.0.s8 %v1136
        %v1138 = vperm.slane %v1130, %v1137
        %v1139 = vrot.slane %v1134, 4
        %v1140 = vsel %vm484, %v1139, %v1122
        %v1141 = vrot.slane %v1122, 4
        %v1142 = vsel %vm484, %v1134, %v1141
        %v1144 = vunpack.c.l.s4 1934713408
        %v1145 = vunpack.c.0.s8 %v1144
        %v1146 = vperm.slane %v1140, %v1145
        %v1148 = vunpack.c.l.s4 1934713408
        %v1149 = vunpack.c.0.s8 %v1148
        %v1150 = vperm.slane %v1142, %v1149
        %v1151 = vrot.slane %v1138, 4
        %v1152 = vsel %vm484, %v1151, %v1126
        %v1153 = vrot.slane %v1126, 4
        %v1154 = vsel %vm484, %v1138, %v1153
        %v1156 = vunpack.c.l.s4 1934713408
        %v1157 = vunpack.c.0.s8 %v1156
        %v1158 = vperm.slane %v1152, %v1157
        %v1160 = vunpack.c.l.s4 1934713408
        %v1161 = vunpack.c.0.s8 %v1160
        %v1162 = vperm.slane %v1154, %v1161
        %v1163 = vrot.slane %v1146, 4
        %v1164 = vsel %vm484, 0.0, %v1163
        %v1165 = vrot.slane %v1150, 4
        %v1166 = vsel %vm484, 0.0, %v1165
        %v1167 = vrot.slane %v1158, 4
        %v1168 = vsel %vm484, 0.0, %v1167
        %v1169 = vrot.slane %v1162, 4
        %v1170 = vsel %vm484, 0.0, %v1169
        %v1171 = vsel %vm484, %v1165, %v1146
        %v1173 = vunpack.c.l.s4 1983009808
        %v1174 = vunpack.c.0.s8 %v1173
        %v1175 = vperm.slane %v1171, %v1174
        %v1176 = vrot.slane %v1166, 4
        %v1177 = vsel %vm484, %v1176, %v1164
        %v1179 = vunpack.c.l.s4 1983009808
        %v1180 = vunpack.c.0.s8 %v1179
        %v1181 = vperm.slane %v1177, %v1180
        %v1182 = vsel %vm484, %v1169, %v1158
        %v1184 = vunpack.c.l.s4 1983009808
        %v1185 = vunpack.c.0.s8 %v1184
        %v1186 = vperm.slane %v1182, %v1185
        %v1187 = vrot.slane %v1170, 4
        %v1188 = vsel %vm484, %v1187, %v1168
        %v1190 = vunpack.c.l.s4 1983009808
        %v1191 = vunpack.c.0.s8 %v1190
        %v1192 = vperm.slane %v1188, %v1191
        %v1193 = vrot.slane %v1181, 4
        %v1194 = vsel %vm484, %v1193, %v1175
        %v1195 = vrot.slane %v1175, 4
        %v1196 = vsel %vm484, %v1181, %v1195
        %v1198 = vunpack.c.l.s4 1934713408
        %v1199 = vunpack.c.0.s8 %v1198
        %v1200 = vperm.slane %v1194, %v1199
        %v1202 = vunpack.c.l.s4 1934713408
        %v1203 = vunpack.c.0.s8 %v1202
        %v1204 = vperm.slane %v1196, %v1203
        %v1205 = vrot.slane %v1192, 4
        %v1206 = vsel %vm484, %v1205, %v1186
        %v1207 = vrot.slane %v1186, 4
        %v1208 = vsel %vm484, %v1192, %v1207
        %v1210 = vunpack.c.l.s4 1934713408
        %v1211 = vunpack.c.0.s8 %v1210
        %v1212 = vperm.slane %v1206, %v1211
        %v1214 = vunpack.c.l.s4 1934713408
        %v1215 = vunpack.c.0.s8 %v1214
        %v1216 = vperm.slane %v1208, %v1215
        %v1217 = vrot.slane %v1212, 4
        %v1218 = vsel %vm484, %v1217, %v1200
        %v1219 = vrot.slane %v1200, 4
        %v1220 = vsel %vm484, %v1212, %v1219
        %v1221 = vrot.slane %v1216, 4
        %v1222 = vsel %vm484, %v1221, %v1204
        %v1223 = vrot.slane %v1204, 4
        %v1224 = vsel %vm484, %v1216, %v1223
        %1226 = vrot.lane.b32.xlu0 %v1220, 8
        %v1227 = vpop.permute.xlu0 %1226
        %1230 = vrot.lane.b32.xlu0 %v1222, 16
        %v1231 = vpop.permute.xlu0 %1230
        %1234 = vrot.lane.b32.xlu0 %v1224, 24
        %v1235 = vpop.permute.xlu0 %1234
        %v1237 = vsel %vm846, %v1218, %v1227
        %vm1238 = vcmask 130048
        %v1239 = vsel %vm1238, %v1237, %v1231
        %vm1240 = vcmask 195584
        %v1241 = vsel %vm1240, %v1239, %v1235
        %v1242 = vpack.c.bf16 %v1241, %v1241
        %v1243 = vld [vmem:[#allocation8] sm:$0xf]
        %v1244 = vld [vmem:[#allocation8 + $0x4] sm:$0xf]
        %v1245 = vld [vmem:[#allocation8 + $0x8] sm:$0xf]
        %v1246 = vld [vmem:[#allocation8 + $0xc] sm:$0xf]
        %v1247 = vld [vmem:[%s5] sm:$0x1]
        %v1249 = vperm.slane %v1247, 0
        %v1255 = vunpack.c.l.b16 %v1243
        %v1256 = vunpack.c.l.b16 %v1244
        %v1257 = vunpack.c.l.b16 %v1245
        %v1258 = vunpack.c.l.b16 %v1246
        %v1259 = vpack.c.b16 %v1256, %v1255
        %v1260 = vpack.c.b16 %v1258, %v1257
        %v1264 = vsel %vm456, %v1242, 0
        %1266 = vmatpush.bf16.msra.mxu0 0
        %1267 = vmatpush.bf16.msra.mxu0 0
        %1268 = vmatpush.bf16.msra.mxu0 0
        %1269 = vmatpush.bf16.msra.mxu0 0
        %1270 = vmatpush.bf16.msra.mxu0 0
        %1271 = vmatpush.bf16.msra.mxu0 0
        %1272 = vmatpush.bf16.msra.mxu0 %v1260
        %1273 = vmatpush.bf16.msra.mxu0 %v1259
        %1274 = vmatmul.bf16.gmra.mxu0 %v1264
        %v1275 = vpop.f32.mrf.mxu0
        %v1276 = vadd.f32 %v1249, %v1275
        %v1277 = vpop.f32.mrf.mxu0
        %1278 = vdwg.mxu0
        %v1279 = vmax.f32 %v1276, 0.0
        %v1280 = vadd.f32 %v1279, %v434
        %v1281 = vsel %vm456, %v1280, 0.0
        %1282 = vadd.xlane.f32.xlu0 %v1281
        %v1283 = vpop.xlane.xlu0 %1282
        %v1284 = vrcp.pop 32.0
        %v1285 = vmul.f32 32.0, %v1284
        %v1286 = vsub.f32 1.0, %v1285
        %v1287 = vmul.f32 %v1284, %v1286
        %v1288 = vadd.f32 %v1284, %v1287
        %vm1289 = vweird.f32 %v1284
        %v1290 = vsel %vm1289, %v1284, %v1288
        %v1291 = vmul.f32 %v1283, %v1290
        %v1292 = vsub.f32 %v1280, %v1291
        %v1293 = vmul.f32 %v1292, %v1292
        %v1294 = vsel %vm456, %v1293, 0.0
        %1295 = vadd.xlane.f32.xlu0 %v1294
        %v1296 = vpop.xlane.xlu0 %1295
        %v1297 = vmul.f32 %v1296, %v1290
        %v1298 = vadd.f32 %v1297, 1e-05
        %v1299 = vrsqrt.pop %v1298
        %v1300 = vmul.f32 %v1299, %v1298
        %v1301 = vmul.f32 %v1300, %v1299
        %v1302 = vmul.f32 0.5, %v1301
        %v1303 = vsub.f32 1.5, %v1302
        %v1304 = vmul.f32 %v1299, %v1303
        %vm1305 = vweird.f32 %v1298
        %vm1306 = vweird.f32 %v1299
        %vm1307 = vmor %vm1305, %vm1306
        %v1308 = vsel %vm1307, %v1299, %v1304
        %v1309 = vmul.f32 %v1292, %v1308
        %v1310 = vld [vmem:[%s6] sm:$0x1]
        %v1312 = vperm.slane %v1310, 0
        %v1314 = vmul.f32 %v1309, %v1312
        %v1315 = vld [vmem:[%s7] sm:$0x1]
        %v1317 = vperm.slane %v1315, 0
        %v1319 = vadd.f32 %v1314, %v1317
        %1320 = vst.msk [vmem:[%s425] sm:$0xff] %vm456, %v1319
        %s1321 = sand.u32 %s220, 1
        %s1322 = scalar_lea.sflag [#allocation4], %s1321
        %s1323 = sand.u32 %s220, 1
        %s1324 = smul.addr %s1323, 8
        %s1325 = scalar_lea.vmem [#allocation10], %s1324
        %s1326 = sand.u32 %s246, 1
        %s1327 = scalar_lea.sflag [#allocation12], %s1326
        %s1328 = sand.u32 %s246, 1
        %s1329 = smul.addr %s1328, 16
        %s1330 = scalar_lea.vmem [#allocation11], %s1329
        // Predicated region
        $region69: #{tpu_custom_call.1} parent=51 // pred_check
          %p1331 = pneg %p230
        $region70: #{tpu_custom_call.1} parent=51 // pred_check_branch
          %1333 = sbr.rel (%p1331) target = $region72
        $region71: #{tpu_custom_call.1} parent=51 // pred_region
          %1335 = vsyncadd %s1322, 0
          %s1336 = smul.addr %s34, 8
          %s1337 = scalar_lea.hbm %s8, %s1336
          %s1339 = sshll.u32 %s1325, 4
          %s1340 = int_to_ptr.vmem [resolvable:$true] %s1339
          %s1341 = sshll.u32 %s1337, 4
          %s1342 = int_to_ptr.hbm [resolvable:$true] %s1341
          %1344 = dma.vmem_to_hbm [thread:$0]  %s1340, 128, %s1342, %s1322
        $region72: #{tpu_custom_call.1} parent=51 // pred_fallthru
          _
        // Predicated region
        $region73: #{tpu_custom_call.1} parent=51 // pred_check
          %p1345 = pneg %p256
        $region74: #{tpu_custom_call.1} parent=51 // pred_check_branch
          %1347 = sbr.rel (%p1345) target = $region76
        $region75: #{tpu_custom_call.1} parent=51 // pred_region
          %1349 = vsyncadd %s1327, 0
          %s1350 = smul.addr %s34, 4
          %s1351 = smul.addr %s1350, 4
          %s1352 = scalar_lea.hbm %s9, %s1351
          %s1353 = sshll.u32 %s1330, 4
          %s1354 = int_to_ptr.vmem [resolvable:$true] %s1353
          %s1355 = sshll.u32 %s1352, 4
          %s1356 = int_to_ptr.hbm [resolvable:$true] %s1355
          %1361 = dma.vmem_to_hbm [thread:$0]  %s1354, 256, %s1356, %s1327, 64, 64, 4
        $region76: #{tpu_custom_call.1} parent=51 // pred_fallthru
          _
      $region52: #{tpu_custom_call.1} parent=5 // pred_fallthru
        _
      %p1362 = scmp.le.s32.totalorder 2, %s29
      // Predicated region
      $region77: #{tpu_custom_call.1} parent=5 // pred_check
        %p1363 = pneg %p1362
      $region78: #{tpu_custom_call.1} parent=5 // pred_check_branch
        %1365 = sbr.rel (%p1363) target = $region80
      $region79: #{tpu_custom_call.1} parent=5 // pred_region
        %s1366 = ssub.s32 %s29, 2
        // Predicated region
        $region81: #{tpu_custom_call.1} parent=79 // pred_check
          %p1367 = pneg %p236
        $region82: #{tpu_custom_call.1} parent=79 // pred_check_branch
          %1369 = sbr.rel (%p1367) target = $region84
        $region83: #{tpu_custom_call.1} parent=79 // pred_region
          %s1370 = sand.u32 %s221, 1
          %s1371 = scalar_lea.sflag [#allocation4], %s1370
          %s1372 = sand.u32 %s221, 1
          %s1373 = smul.addr %s1372, 8
          %s1374 = scalar_lea.vmem [#allocation10], %s1373
          %1376 = dma.done %s1371, 128
        $region84: #{tpu_custom_call.1} parent=79 // pred_fallthru
          _
        // Predicated region
        $region85: #{tpu_custom_call.1} parent=79 // pred_check
          %p1377 = pneg %p262
        $region86: #{tpu_custom_call.1} parent=79 // pred_check_branch
          %1379 = sbr.rel (%p1377) target = $region88
        $region87: #{tpu_custom_call.1} parent=79 // pred_region
          %s1380 = sand.u32 %s247, 1
          %s1381 = scalar_lea.sflag [#allocation12], %s1380
          %s1382 = sand.u32 %s247, 1
          %s1383 = smul.addr %s1382, 16
          %s1384 = scalar_lea.vmem [#allocation11], %s1383
          %1386 = dma.done %s1381, 256
        $region88: #{tpu_custom_call.1} parent=79 // pred_fallthru
          _
      $region80: #{tpu_custom_call.1} parent=5 // pred_fallthru
        _
    $region6: #{tpu_custom_call.1} parent=1 // loop_footer
      %s33 = sadd.s32 1, %s29
    $region7: #{tpu_custom_call.1} parent=1 // loop_footer_branch
      %28 = sbr.rel target = $region3
    $region8: #{tpu_custom_call.1} parent=1 // loop_exit
      _
    %1387 = vsyncpa [#allocation3], 1
    %s1388 = scalar_lea.sflag [#allocation3], 1
    %1389 = vsyncpa %s1388, 1
    %1390 = vsyncpa [#allocation6], 1
    %s1391 = scalar_lea.sflag [#allocation6], 1
    %1392 = vsyncpa %s1391, 1
    %1393 = vsyncpa [#allocation9], 1
    %1394 = vsyncpa [#allocation4], 1
    %s1395 = scalar_lea.sflag [#allocation4], 1
    %1396 = vsyncpa %s1395, 1
    %1397 = vsyncpa [#allocation12], 1
    %s1398 = scalar_lea.sflag [#allocation12], 1
    %1399 = vsyncpa %s1398, 1

</llo_original>
